<compile_context>
chip_gen: v5e
topology: v5e:2x2
jax: 0.10.0
libtpu: 0.0.40
codegen_flags: <defaults>
</compile_context>

<pallas_src>
import math
import functools

import jax
import jax.numpy as jnp
from jax import lax
from jax.experimental import pallas as pl
from jax.experimental.pallas import tpu as pltpu


# Large finite negative instead of -inf: avoids inf-inf NaNs if this kernel is
# ever reused with padding/segment masks; exp(-1e30 - m) underflows to 0 in f32.
_MASK_VALUE = -1e30


def _mha_kernel(xq_ref, xkv_ref, wq_ref, bq_ref, wkv_ref, bkv_ref,
                wo_ref, bo_ref, o_ref,
                q_scr, m_scr, l_scr, acc_scr,
                *, num_heads, d_k, block_q, block_kv):
    d_model = num_heads * d_k
    qi = pl.program_id(1)
    ki = pl.program_id(2)
    q_start = qi * block_q
    kv_start = ki * block_kv

    # ---- init (once per (batch, q-block)): fused all-heads Q projection.
    #      1/sqrt(d_k) is already folded into wq/bq on the host.
    @pl.when(ki == 0)
    def _init():
        q = jnp.dot(xq_ref[0], wq_ref[...],
                    preferred_element_type=jnp.float32) + bq_ref[...]
        for hh in range(num_heads):
            q_scr[hh] = q[:, hh * d_k:(hh + 1) * d_k]
        m_scr[...] = jnp.full_like(m_scr, _MASK_VALUE)
        l_scr[...] = jnp.zeros_like(l_scr)
        acc_scr[...] = jnp.zeros_like(acc_scr)

    # ---- flash inner step; skip KV blocks entirely above the causal diagonal.
    @pl.when(kv_start <= q_start + block_q - 1)
    def _compute():
        # Fused K|V projection for all heads in a single MXU pass.
        kv = jnp.dot(xkv_ref[0], wkv_ref[...],
                     preferred_element_type=jnp.float32) + bkv_ref[...]

        row = q_start + lax.broadcasted_iota(jnp.int32, (block_q, block_kv), 0)
        col = kv_start + lax.broadcasted_iota(jnp.int32, (block_q, block_kv), 1)
        causal = col <= row

        for hh in range(num_heads):
            k_h = kv[:, hh * d_k:(hh + 1) * d_k]                       # (tkv, d_k)
            v_h = kv[:, d_model + hh * d_k:d_model + (hh + 1) * d_k]   # (tkv, d_k)
            # s = q_h @ k_h.T without an explicit transpose.
            s = lax.dot_general(q_scr[hh], k_h,
                                (((1,), (1,)), ((), ())),
                                preferred_element_type=jnp.float32)    # (tq, tkv)
            s = jnp.where(causal, s, _MASK_VALUE)

            m_prev = m_scr[hh]                                         # (tq, 1)
            m_new = jnp.maximum(m_prev, jnp.max(s, axis=-1, keepdims=True))
            alpha = jnp.exp(m_prev - m_new)
            p = jnp.exp(s - m_new)
            l_scr[hh] = alpha * l_scr[hh] + jnp.sum(p, axis=-1, keepdims=True)
            acc_scr[hh] = alpha * acc_scr[hh] + jnp.dot(
                p, v_h, preferred_element_type=jnp.float32)
            m_scr[hh] = m_new

    # ---- finalize (last KV step): normalize and fuse the output projection.
    @pl.when(ki == pl.num_programs(2) - 1)
    def _finalize():
        y = jnp.zeros((block_q, d_model), jnp.float32)
        for hh in range(num_heads):
            att_h = acc_scr[hh] * pl.reciprocal(l_scr[hh])             # exact recip
            y = y + jnp.dot(att_h, wo_ref[hh * d_k:(hh + 1) * d_k, :],
                            preferred_element_type=jnp.float32)
        y = y + bo_ref[...]
        o_ref[0] = y.astype(o_ref.dtype)


def _pack_params(params, d_k):
    """Pack per-head (h, D, d_k) weights into fused, lane-dense matrices."""
    wq, bq, wk, bk, wv, bv, wo, bo = params
    h, D, _ = wq.shape
    scale = 1.0 / math.sqrt(d_k)

    def cat_heads(w):  # (h, D, d_k) -> (D, h*d_k), head-major columns
        return jnp.transpose(w, (1, 0, 2)).reshape(D, h * d_k)

    wq_all = cat_heads(wq) * scale                       # scale folded into Wq
    bq_all = bq.reshape(1, h * d_k) * scale
    wkv_all = jnp.concatenate([cat_heads(wk), cat_heads(wv)], axis=1)   # (D, 2D)
    bkv_all = jnp.concatenate(
        [bk.reshape(1, h * d_k), bv.reshape(1, h * d_k)], axis=1)       # (1, 2D)
    return wq_all, bq_all, wkv_all, bkv_all, wo, bo


def multi_head_attention(x, params, *, block_q=128, block_kv=128):
    """x: (B, T, D).  params: per-head stacked weights (see __main__)."""
    wq = params[0]
    B, T, D = x.shape
    h, _, d_k = wq.shape
    assert h * d_k == D

    block_q = min(block_q, T)
    block_kv = min(block_kv, T)
    assert T % block_q == 0 and T % block_kv == 0

    wq_all, bq_all, wkv_all, bkv_all, wo, bo = _pack_params(params, d_k)

    grid = (B, T // block_q, T // block_kv)
    kernel = functools.partial(_mha_kernel, num_heads=h, d_k=d_k,
                               block_q=block_q, block_kv=block_kv)

    return pl.pallas_call(
        kernel,
        out_shape=jax.ShapeDtypeStruct((B, T, D), x.dtype),
        grid_spec=pltpu.PrefetchScalarGridSpec(
            num_scalar_prefetch=0,
            grid=grid,
            in_specs=[
                pl.BlockSpec((1, block_q, D), lambda b, qi, ki: (b, qi, 0)),   # x (q rows)
                pl.BlockSpec((1, block_kv, D), lambda b, qi, ki: (b, ki, 0)),  # x (kv rows)
                pl.BlockSpec((D, D), lambda b, qi, ki: (0, 0)),                # Wq (pre-scaled)
                pl.BlockSpec((1, D), lambda b, qi, ki: (0, 0)),                # bq (pre-scaled)
                pl.BlockSpec((D, 2 * D), lambda b, qi, ki: (0, 0)),            # Wk | Wv
                pl.BlockSpec((1, 2 * D), lambda b, qi, ki: (0, 0)),            # bk | bv
                pl.BlockSpec((D, D), lambda b, qi, ki: (0, 0)),                # Wo
                pl.BlockSpec((1, D), lambda b, qi, ki: (0, 0)),                # bo
            ],
            out_specs=pl.BlockSpec((1, block_q, D), lambda b, qi, ki: (b, qi, 0)),
            scratch_shapes=[
                pltpu.VMEM((h, block_q, d_k), jnp.float32),  # Q (pre-scaled, per head)
                pltpu.VMEM((h, block_q, 1), jnp.float32),    # running max m
                pltpu.VMEM((h, block_q, 1), jnp.float32),    # running sum l
                pltpu.VMEM((h, block_q, d_k), jnp.float32),  # output accumulator
            ],
        ),
        compiler_params=pltpu.CompilerParams(
            dimension_semantics=("parallel", "parallel", "arbitrary")),
    )(x, x, wq_all, bq_all, wkv_all, bkv_all, wo, bo)


# ---------------------------------------------------------------------------
# Pure-JAX reference (mirrors the PyTorch module exactly)
# ---------------------------------------------------------------------------
def reference(x, params):
    wq, bq, wk, bk, wv, bv, wo, bo = params
    B, T, D = x.shape
    h, _, d_k = wq.shape
    outs = []
    for i in range(h):
        q = x @ wq[i] + bq[i, 0]
        k = x @ wk[i] + bk[i, 0]
        v = x @ wv[i] + bv[i, 0]
        s = (q @ jnp.swapaxes(k, -2, -1)) / math.sqrt(d_k)
        mask = jnp.tril(jnp.ones((T, T), dtype=bool))
        s = jnp.where(mask, s, -jnp.inf)
        sm = jax.nn.softmax(s, axis=-1)
        outs.append(sm @ v)
    y_cat = jnp.concatenate(outs, axis=-1)
    return y_cat @ wo + bo[0]


if __name__ == "__main__":
    # Small shapes consistent with the module.
    B, T, d_model, h = 2, 8, 32, 4
    d_k = d_model // h

    key = jax.random.PRNGKey(0)
    keys = jax.random.split(key, 9)
    scale = 1.0 / math.sqrt(d_model)

    # Per-head stacked parameters, already transposed so kernels compute x @ W + b.
    wq = jax.random.normal(keys[0], (h, d_model, d_k), jnp.float32) * scale
    bq = jax.random.normal(keys[1], (h, 1, d_k), jnp.float32) * scale
    wk = jax.random.normal(keys[2], (h, d_model, d_k), jnp.float32) * scale
    bk = jax.random.normal(keys[3], (h, 1, d_k), jnp.float32) * scale
    wv = jax.random.normal(keys[4], (h, d_model, d_k), jnp.float32) * scale
    bv = jax.random.normal(keys[5], (h, 1, d_k), jnp.float32) * scale
    wo = jax.random.normal(keys[6], (d_model, d_model), jnp.float32) * scale
    bo = jax.random.normal(keys[7], (1, d_model), jnp.float32) * scale
    params = (wq, bq, wk, bk, wv, bv, wo, bo)

    x = jax.random.normal(keys[8], (B, T, d_model), jnp.float32)

    y = multi_head_attention(x, params)
    y = jax.block_until_ready(y)

    y_ref = reference(x, params)
    assert y.shape == (B, T, d_model)
    assert jnp.allclose(y, y_ref, atol=1e-4, rtol=1e-4)

    print("KERNEL_OK")
</pallas_src>

<mosaic_0001>
module attributes {stable_mosaic.version = 11 : i64} {
  func.func @_mha_kernel(%arg0: i32, %arg1: i32, %arg2: i32, %arg3: memref<1x8x32xf32, #tpu.memory_space<vmem>>, %arg4: memref<1x8x32xf32, #tpu.memory_space<vmem>>, %arg5: memref<32x32xf32, #tpu.memory_space<vmem>>, %arg6: memref<1x32xf32, #tpu.memory_space<vmem>>, %arg7: memref<32x64xf32, #tpu.memory_space<vmem>>, %arg8: memref<1x64xf32, #tpu.memory_space<vmem>>, %arg9: memref<32x32xf32, #tpu.memory_space<vmem>>, %arg10: memref<1x32xf32, #tpu.memory_space<vmem>>, %arg11: memref<1x8x32xf32, #tpu.memory_space<vmem>>, %arg12: memref<4x8x8xf32, #tpu.memory_space<vmem>>, %arg13: memref<4x8x1xf32, #tpu.memory_space<vmem>>, %arg14: memref<4x8x1xf32, #tpu.memory_space<vmem>>, %arg15: memref<4x8x8xf32, #tpu.memory_space<vmem>>) attributes {dimension_semantics = [#tpu.dimension_semantics<parallel>, #tpu.dimension_semantics<parallel>, #tpu.dimension_semantics<arbitrary>], iteration_bounds = array<i64: 2, 1, 1>, scalar_prefetch = 0 : i64, scratch_operands = 4 : i64, tpu.core_type = #tpu.core_type<tc>, window_params = [{transform_indices = @transform_0, window_bounds = array<i64: 1, 8, 32>}, {transform_indices = @transform_1, window_bounds = array<i64: 1, 8, 32>}, {pipeline_mode = #tpu.pipeline_mode<synchronous>, transform_indices = @transform_2, window_bounds = array<i64: 32, 32>}, {pipeline_mode = #tpu.pipeline_mode<synchronous>, transform_indices = @transform_3, window_bounds = array<i64: 1, 32>}, {pipeline_mode = #tpu.pipeline_mode<synchronous>, transform_indices = @transform_4, window_bounds = array<i64: 32, 64>}, {pipeline_mode = #tpu.pipeline_mode<synchronous>, transform_indices = @transform_5, window_bounds = array<i64: 1, 64>}, {pipeline_mode = #tpu.pipeline_mode<synchronous>, transform_indices = @transform_6, window_bounds = array<i64: 32, 32>}, {pipeline_mode = #tpu.pipeline_mode<synchronous>, transform_indices = @transform_7, window_bounds = array<i64: 1, 32>}, {transform_indices = @transform_8, window_bounds = array<i64: 1, 8, 32>}]} {
    %c8_i32 = arith.constant 8 : i32
    %0 = arith.muli %arg1, %c8_i32 : i32
    %c8_i32_0 = arith.constant 8 : i32
    %1 = arith.muli %arg2, %c8_i32_0 : i32
    %c0_i32 = arith.constant 0 : i32
    %2 = arith.cmpi eq, %arg2, %c0_i32 : i32
    %3 = arith.extui %2 : i1 to i32
    %c0_i32_1 = arith.constant 0 : i32
    %4 = arith.cmpi ne, %3, %c0_i32_1 : i32
    scf.if %4 {
      %c0 = arith.constant 0 : index
      %c0_6 = arith.constant 0 : index
      %c0_7 = arith.constant 0 : index
      %13 = vector.load %arg3[%c0, %c0_6, %c0_7] : memref<1x8x32xf32, #tpu.memory_space<vmem>>, vector<1x8x32xf32>
      %14 = vector.shape_cast %13 : vector<1x8x32xf32> to vector<8x32xf32>
      %c0_8 = arith.constant 0 : index
      %c0_9 = arith.constant 0 : index
      %15 = vector.load %arg5[%c0_8, %c0_9] : memref<32x32xf32, #tpu.memory_space<vmem>>, vector<32x32xf32>
      %cst = arith.constant dense<0.000000e+00> : vector<8x32xf32>
      %16 = tpu.matmul %14, %15, %cst {dimension_numbers = #tpu.dot_dimension_numbers<[1], [0], [0], [1], [0, 0, 1, 1], [], []>} : vector<8x32xf32>, vector<32x32xf32>, vector<8x32xf32> -> vector<8x32xf32>
      %c0_10 = arith.constant 0 : index
      %c0_11 = arith.constant 0 : index
      %17 = vector.load %arg6[%c0_10, %c0_11] : memref<1x32xf32, #tpu.memory_space<vmem>>, vector<1x32xf32>
      %18 = vector.broadcast %17 : vector<1x32xf32> to vector<8x32xf32>
      %19 = arith.addf %16, %18 : vector<8x32xf32>
      %20 = vector.extract_strided_slice %19 {offsets = [0, 0], sizes = [8, 8], strides = [1, 1]} : vector<8x32xf32> to vector<8x8xf32>
      %c0_12 = arith.constant 0 : index
      %c0_13 = arith.constant 0 : index
      %c0_14 = arith.constant 0 : index
      %21 = vector.load %arg12[%c0_12, %c0_13, %c0_14] : memref<4x8x8xf32, #tpu.memory_space<vmem>>, vector<1x8x8xf32>
      %22 = vector.shape_cast %21 : vector<1x8x8xf32> to vector<8x8xf32>
      %23 = vector.shape_cast %20 : vector<8x8xf32> to vector<1x8x8xf32>
      tpu.vector_store %arg12[%c0_12, %c0_13, %c0_14], %23 {strides = array<i32>} : memref<4x8x8xf32, #tpu.memory_space<vmem>>, vector<1x8x8xf32>,
      %24 = vector.extract_strided_slice %19 {offsets = [0, 8], sizes = [8, 8], strides = [1, 1]} : vector<8x32xf32> to vector<8x8xf32>
      %c1 = arith.constant 1 : index
      %c0_15 = arith.constant 0 : index
      %c0_16 = arith.constant 0 : index
      %25 = vector.load %arg12[%c1, %c0_15, %c0_16] : memref<4x8x8xf32, #tpu.memory_space<vmem>>, vector<1x8x8xf32>
      %26 = vector.shape_cast %25 : vector<1x8x8xf32> to vector<8x8xf32>
      %27 = vector.shape_cast %24 : vector<8x8xf32> to vector<1x8x8xf32>
      tpu.vector_store %arg12[%c1, %c0_15, %c0_16], %27 {strides = array<i32>} : memref<4x8x8xf32, #tpu.memory_space<vmem>>, vector<1x8x8xf32>,
      %28 = vector.extract_strided_slice %19 {offsets = [0, 16], sizes = [8, 8], strides = [1, 1]} : vector<8x32xf32> to vector<8x8xf32>
      %c2 = arith.constant 2 : index
      %c0_17 = arith.constant 0 : index
      %c0_18 = arith.constant 0 : index
      %29 = vector.load %arg12[%c2, %c0_17, %c0_18] : memref<4x8x8xf32, #tpu.memory_space<vmem>>, vector<1x8x8xf32>
      %30 = vector.shape_cast %29 : vector<1x8x8xf32> to vector<8x8xf32>
      %31 = vector.shape_cast %28 : vector<8x8xf32> to vector<1x8x8xf32>
      tpu.vector_store %arg12[%c2, %c0_17, %c0_18], %31 {strides = array<i32>} : memref<4x8x8xf32, #tpu.memory_space<vmem>>, vector<1x8x8xf32>,
      %32 = vector.extract_strided_slice %19 {offsets = [0, 24], sizes = [8, 8], strides = [1, 1]} : vector<8x32xf32> to vector<8x8xf32>
      %c3 = arith.constant 3 : index
      %c0_19 = arith.constant 0 : index
      %c0_20 = arith.constant 0 : index
      %33 = vector.load %arg12[%c3, %c0_19, %c0_20] : memref<4x8x8xf32, #tpu.memory_space<vmem>>, vector<1x8x8xf32>
      %34 = vector.shape_cast %33 : vector<1x8x8xf32> to vector<8x8xf32>
      %35 = vector.shape_cast %32 : vector<8x8xf32> to vector<1x8x8xf32>
      tpu.vector_store %arg12[%c3, %c0_19, %c0_20], %35 {strides = array<i32>} : memref<4x8x8xf32, #tpu.memory_space<vmem>>, vector<1x8x8xf32>,
      %cst_21 = arith.constant -1.000000e+30 : f32
      %36 = vector.broadcast %cst_21 : f32 to vector<4x8x1xf32>
      %c0_22 = arith.constant 0 : index
      %c0_23 = arith.constant 0 : index
      %c0_24 = arith.constant 0 : index
      %37 = vector.load %arg13[%c0_22, %c0_23, %c0_24] : memref<4x8x1xf32, #tpu.memory_space<vmem>>, vector<4x8x1xf32>
      tpu.vector_store %arg13[%c0_22, %c0_23, %c0_24], %36 {strides = array<i32>} : memref<4x8x1xf32, #tpu.memory_space<vmem>>, vector<4x8x1xf32>,
      %cst_25 = arith.constant 0.000000e+00 : f32
      %38 = vector.broadcast %cst_25 : f32 to vector<4x8x1xf32>
      %c0_26 = arith.constant 0 : index
      %c0_27 = arith.constant 0 : index
      %c0_28 = arith.constant 0 : index
      %39 = vector.load %arg14[%c0_26, %c0_27, %c0_28] : memref<4x8x1xf32, #tpu.memory_space<vmem>>, vector<4x8x1xf32>
      tpu.vector_store %arg14[%c0_26, %c0_27, %c0_28], %38 {strides = array<i32>} : memref<4x8x1xf32, #tpu.memory_space<vmem>>, vector<4x8x1xf32>,
      %cst_29 = arith.constant 0.000000e+00 : f32
      %40 = vector.broadcast %cst_29 : f32 to vector<4x8x8xf32>
      %c0_30 = arith.constant 0 : index
      %c0_31 = arith.constant 0 : index
      %c0_32 = arith.constant 0 : index
      %41 = vector.load %arg15[%c0_30, %c0_31, %c0_32] : memref<4x8x8xf32, #tpu.memory_space<vmem>>, vector<4x8x8xf32>
      tpu.vector_store %arg15[%c0_30, %c0_31, %c0_32], %40 {strides = array<i32>} : memref<4x8x8xf32, #tpu.memory_space<vmem>>, vector<4x8x8xf32>,
    } else {
    }
    %c8_i32_2 = arith.constant 8 : i32
    %5 = arith.addi %0, %c8_i32_2 : i32
    %c1_i32 = arith.constant 1 : i32
    %6 = arith.subi %5, %c1_i32 : i32
    %7 = arith.cmpi sle, %1, %6 : i32
    %8 = arith.extui %7 : i1 to i32
    %c0_i32_3 = arith.constant 0 : i32
    %9 = arith.cmpi ne, %8, %c0_i32_3 : i32
    scf.if %9 {
      %c0 = arith.constant 0 : index
      %c0_6 = arith.constant 0 : index
      %c0_7 = arith.constant 0 : index
      %13 = vector.load %arg4[%c0, %c0_6, %c0_7] : memref<1x8x32xf32, #tpu.memory_space<vmem>>, vector<1x8x32xf32>
      %14 = vector.shape_cast %13 : vector<1x8x32xf32> to vector<8x32xf32>
      %c0_8 = arith.constant 0 : index
      %c0_9 = arith.constant 0 : index
      %15 = vector.load %arg7[%c0_8, %c0_9] : memref<32x64xf32, #tpu.memory_space<vmem>>, vector<32x64xf32>
      %cst = arith.constant dense<0.000000e+00> : vector<8x64xf32>
      %16 = tpu.matmul %14, %15, %cst {dimension_numbers = #tpu.dot_dimension_numbers<[1], [0], [0], [1], [0, 0, 1, 1], [], []>} : vector<8x32xf32>, vector<32x64xf32>, vector<8x64xf32> -> vector<8x64xf32>
      %c0_10 = arith.constant 0 : index
      %c0_11 = arith.constant 0 : index
      %17 = vector.load %arg8[%c0_10, %c0_11] : memref<1x64xf32, #tpu.memory_space<vmem>>, vector<1x64xf32>
      %18 = vector.broadcast %17 : vector<1x64xf32> to vector<8x64xf32>
      %19 = arith.addf %16, %18 : vector<8x64xf32>
      %20 = tpu.iota {dimensions = array<i32: 0>} : vector<8x8xi32>
      %21 = vector.broadcast %0 : i32 to vector<8x8xi32>
      %22 = arith.addi %21, %20 : vector<8x8xi32>
      %23 = tpu.iota {dimensions = array<i32: 1>} : vector<8x8xi32>
      %24 = vector.broadcast %1 : i32 to vector<8x8xi32>
      %25 = arith.addi %24, %23 : vector<8x8xi32>
      %26 = arith.cmpi sle, %25, %22 : vector<8x8xi32>
      %27 = vector.extract_strided_slice %19 {offsets = [0, 0], sizes = [8, 8], strides = [1, 1]} : vector<8x64xf32> to vector<8x8xf32>
      %28 = vector.extract_strided_slice %19 {offsets = [0, 32], sizes = [8, 8], strides = [1, 1]} : vector<8x64xf32> to vector<8x8xf32>
      %c0_12 = arith.constant 0 : index
      %c0_13 = arith.constant 0 : index
      %c0_14 = arith.constant 0 : index
      %29 = vector.load %arg12[%c0_12, %c0_13, %c0_14] : memref<4x8x8xf32, #tpu.memory_space<vmem>>, vector<1x8x8xf32>
      %30 = vector.shape_cast %29 : vector<1x8x8xf32> to vector<8x8xf32>
      %cst_15 = arith.constant dense<0.000000e+00> : vector<8x8xf32>
      %31 = tpu.matmul %30, %27, %cst_15 {dimension_numbers = #tpu.dot_dimension_numbers<[1], [1], [0], [0], [0, 0, 1, 0], [], []>} : vector<8x8xf32>, vector<8x8xf32>, vector<8x8xf32> -> vector<8x8xf32>
      %cst_16 = arith.constant -1.000000e+30 : f32
      %32 = vector.broadcast %cst_16 : f32 to vector<8x8xf32>
      %33 = arith.select %26, %31, %32 : vector<8x8xi1>, vector<8x8xf32>
      %c0_17 = arith.constant 0 : index
      %c0_18 = arith.constant 0 : index
      %c0_19 = arith.constant 0 : index
      %34 = vector.load %arg13[%c0_17, %c0_18, %c0_19] : memref<4x8x1xf32, #tpu.memory_space<vmem>>, vector<1x8x1xf32>
      %35 = vector.shape_cast %34 : vector<1x8x1xf32> to vector<8x1xf32>
      %cst_20 = arith.constant dense<0xFF800000> : vector<8xf32>
      %36 = vector.multi_reduction <maximumf>, %33, %cst_20 [1] : vector<8x8xf32> to vector<8xf32>
      %37 = vector.shape_cast %36 : vector<8xf32> to vector<8x1xf32>
      %38 = arith.maximumf %35, %37 : vector<8x1xf32>
      %39 = arith.subf %35, %38 : vector<8x1xf32>
      %40 = math.exp %39 : vector<8x1xf32>
      %41 = vector.broadcast %38 : vector<8x1xf32> to vector<8x8xf32>
      %42 = arith.subf %33, %41 : vector<8x8xf32>
      %43 = math.exp %42 : vector<8x8xf32>
      %c0_21 = arith.constant 0 : index
      %c0_22 = arith.constant 0 : index
      %c0_23 = arith.constant 0 : index
      %44 = vector.load %arg14[%c0_21, %c0_22, %c0_23] : memref<4x8x1xf32, #tpu.memory_space<vmem>>, vector<1x8x1xf32>
      %45 = vector.shape_cast %44 : vector<1x8x1xf32> to vector<8x1xf32>
      %46 = arith.mulf %40, %45 : vector<8x1xf32>
      %cst_24 = arith.constant dense<0.000000e+00> : vector<8xf32>
      %47 = vector.multi_reduction <add>, %43, %cst_24 [1] : vector<8x8xf32> to vector<8xf32>
      %48 = vector.shape_cast %47 : vector<8xf32> to vector<8x1xf32>
      %49 = arith.addf %46, %48 : vector<8x1xf32>
      %c0_25 = arith.constant 0 : index
      %c0_26 = arith.constant 0 : index
      %c0_27 = arith.constant 0 : index
      %50 = vector.load %arg14[%c0_25, %c0_26, %c0_27] : memref<4x8x1xf32, #tpu.memory_space<vmem>>, vector<1x8x1xf32>
      %51 = vector.shape_cast %50 : vector<1x8x1xf32> to vector<8x1xf32>
      %52 = vector.shape_cast %49 : vector<8x1xf32> to vector<1x8x1xf32>
      tpu.vector_store %arg14[%c0_25, %c0_26, %c0_27], %52 {strides = array<i32>} : memref<4x8x1xf32, #tpu.memory_space<vmem>>, vector<1x8x1xf32>,
      %c0_28 = arith.constant 0 : index
      %c0_29 = arith.constant 0 : index
      %c0_30 = arith.constant 0 : index
      %53 = vector.load %arg15[%c0_28, %c0_29, %c0_30] : memref<4x8x8xf32, #tpu.memory_space<vmem>>, vector<1x8x8xf32>
      %54 = vector.shape_cast %53 : vector<1x8x8xf32> to vector<8x8xf32>
      %55 = vector.broadcast %40 : vector<8x1xf32> to vector<8x8xf32>
      %56 = arith.mulf %55, %54 : vector<8x8xf32>
      %cst_31 = arith.constant dense<0.000000e+00> : vector<8x8xf32>
      %57 = tpu.matmul %43, %28, %cst_31 {dimension_numbers = #tpu.dot_dimension_numbers<[1], [0], [0], [1], [0, 0, 1, 1], [], []>} : vector<8x8xf32>, vector<8x8xf32>, vector<8x8xf32> -> vector<8x8xf32>
      %58 = arith.addf %56, %57 : vector<8x8xf32>
      %c0_32 = arith.constant 0 : index
      %c0_33 = arith.constant 0 : index
      %c0_34 = arith.constant 0 : index
      %59 = vector.load %arg15[%c0_32, %c0_33, %c0_34] : memref<4x8x8xf32, #tpu.memory_space<vmem>>, vector<1x8x8xf32>
      %60 = vector.shape_cast %59 : vector<1x8x8xf32> to vector<8x8xf32>
      %61 = vector.shape_cast %58 : vector<8x8xf32> to vector<1x8x8xf32>
      tpu.vector_store %arg15[%c0_32, %c0_33, %c0_34], %61 {strides = array<i32>} : memref<4x8x8xf32, #tpu.memory_space<vmem>>, vector<1x8x8xf32>,
      %c0_35 = arith.constant 0 : index
      %c0_36 = arith.constant 0 : index
      %c0_37 = arith.constant 0 : index
      %62 = vector.load %arg13[%c0_35, %c0_36, %c0_37] : memref<4x8x1xf32, #tpu.memory_space<vmem>>, vector<1x8x1xf32>
      %63 = vector.shape_cast %62 : vector<1x8x1xf32> to vector<8x1xf32>
      %64 = vector.shape_cast %38 : vector<8x1xf32> to vector<1x8x1xf32>
      tpu.vector_store %arg13[%c0_35, %c0_36, %c0_37], %64 {strides = array<i32>} : memref<4x8x1xf32, #tpu.memory_space<vmem>>, vector<1x8x1xf32>,
      %65 = vector.extract_strided_slice %19 {offsets = [0, 8], sizes = [8, 8], strides = [1, 1]} : vector<8x64xf32> to vector<8x8xf32>
      %66 = vector.extract_strided_slice %19 {offsets = [0, 40], sizes = [8, 8], strides = [1, 1]} : vector<8x64xf32> to vector<8x8xf32>
      %c1 = arith.constant 1 : index
      %c0_38 = arith.constant 0 : index
      %c0_39 = arith.constant 0 : index
      %67 = vector.load %arg12[%c1, %c0_38, %c0_39] : memref<4x8x8xf32, #tpu.memory_space<vmem>>, vector<1x8x8xf32>
      %68 = vector.shape_cast %67 : vector<1x8x8xf32> to vector<8x8xf32>
      %cst_40 = arith.constant dense<0.000000e+00> : vector<8x8xf32>
      %69 = tpu.matmul %68, %65, %cst_40 {dimension_numbers = #tpu.dot_dimension_numbers<[1], [1], [0], [0], [0, 0, 1, 0], [], []>} : vector<8x8xf32>, vector<8x8xf32>, vector<8x8xf32> -> vector<8x8xf32>
      %cst_41 = arith.constant -1.000000e+30 : f32
      %70 = vector.broadcast %cst_41 : f32 to vector<8x8xf32>
      %71 = arith.select %26, %69, %70 : vector<8x8xi1>, vector<8x8xf32>
      %c1_42 = arith.constant 1 : index
      %c0_43 = arith.constant 0 : index
      %c0_44 = arith.constant 0 : index
      %72 = vector.load %arg13[%c1_42, %c0_43, %c0_44] : memref<4x8x1xf32, #tpu.memory_space<vmem>>, vector<1x8x1xf32>
      %73 = vector.shape_cast %72 : vector<1x8x1xf32> to vector<8x1xf32>
      %cst_45 = arith.constant dense<0xFF800000> : vector<8xf32>
      %74 = vector.multi_reduction <maximumf>, %71, %cst_45 [1] : vector<8x8xf32> to vector<8xf32>
      %75 = vector.shape_cast %74 : vector<8xf32> to vector<8x1xf32>
      %76 = arith.maximumf %73, %75 : vector<8x1xf32>
      %77 = arith.subf %73, %76 : vector<8x1xf32>
      %78 = math.exp %77 : vector<8x1xf32>
      %79 = vector.broadcast %76 : vector<8x1xf32> to vector<8x8xf32>
      %80 = arith.subf %71, %79 : vector<8x8xf32>
      %81 = math.exp %80 : vector<8x8xf32>
      %c1_46 = arith.constant 1 : index
      %c0_47 = arith.constant 0 : index
      %c0_48 = arith.constant 0 : index
      %82 = vector.load %arg14[%c1_46, %c0_47, %c0_48] : memref<4x8x1xf32, #tpu.memory_space<vmem>>, vector<1x8x1xf32>
      %83 = vector.shape_cast %82 : vector<1x8x1xf32> to vector<8x1xf32>
      %84 = arith.mulf %78, %83 : vector<8x1xf32>
      %cst_49 = arith.constant dense<0.000000e+00> : vector<8xf32>
      %85 = vector.multi_reduction <add>, %81, %cst_49 [1] : vector<8x8xf32> to vector<8xf32>
      %86 = vector.shape_cast %85 : vector<8xf32> to vector<8x1xf32>
      %87 = arith.addf %84, %86 : vector<8x1xf32>
      %c1_50 = arith.constant 1 : index
      %c0_51 = arith.constant 0 : index
      %c0_52 = arith.constant 0 : index
      %88 = vector.load %arg14[%c1_50, %c0_51, %c0_52] : memref<4x8x1xf32, #tpu.memory_space<vmem>>, vector<1x8x1xf32>
      %89 = vector.shape_cast %88 : vector<1x8x1xf32> to vector<8x1xf32>
      %90 = vector.shape_cast %87 : vector<8x1xf32> to vector<1x8x1xf32>
      tpu.vector_store %arg14[%c1_50, %c0_51, %c0_52], %90 {strides = array<i32>} : memref<4x8x1xf32, #tpu.memory_space<vmem>>, vector<1x8x1xf32>,
      %c1_53 = arith.constant 1 : index
      %c0_54 = arith.constant 0 : index
      %c0_55 = arith.constant 0 : index
      %91 = vector.load %arg15[%c1_53, %c0_54, %c0_55] : memref<4x8x8xf32, #tpu.memory_space<vmem>>, vector<1x8x8xf32>
      %92 = vector.shape_cast %91 : vector<1x8x8xf32> to vector<8x8xf32>
      %93 = vector.broadcast %78 : vector<8x1xf32> to vector<8x8xf32>
      %94 = arith.mulf %93, %92 : vector<8x8xf32>
      %cst_56 = arith.constant dense<0.000000e+00> : vector<8x8xf32>
      %95 = tpu.matmul %81, %66, %cst_56 {dimension_numbers = #tpu.dot_dimension_numbers<[1], [0], [0], [1], [0, 0, 1, 1], [], []>} : vector<8x8xf32>, vector<8x8xf32>, vector<8x8xf32> -> vector<8x8xf32>
      %96 = arith.addf %94, %95 : vector<8x8xf32>
      %c1_57 = arith.constant 1 : index
      %c0_58 = arith.constant 0 : index
      %c0_59 = arith.constant 0 : index
      %97 = vector.load %arg15[%c1_57, %c0_58, %c0_59] : memref<4x8x8xf32, #tpu.memory_space<vmem>>, vector<1x8x8xf32>
      %98 = vector.shape_cast %97 : vector<1x8x8xf32> to vector<8x8xf32>
      %99 = vector.shape_cast %96 : vector<8x8xf32> to vector<1x8x8xf32>
      tpu.vector_store %arg15[%c1_57, %c0_58, %c0_59], %99 {strides = array<i32>} : memref<4x8x8xf32, #tpu.memory_space<vmem>>, vector<1x8x8xf32>,
      %c1_60 = arith.constant 1 : index
      %c0_61 = arith.constant 0 : index
      %c0_62 = arith.constant 0 : index
      %100 = vector.load %arg13[%c1_60, %c0_61, %c0_62] : memref<4x8x1xf32, #tpu.memory_space<vmem>>, vector<1x8x1xf32>
      %101 = vector.shape_cast %100 : vector<1x8x1xf32> to vector<8x1xf32>
      %102 = vector.shape_cast %76 : vector<8x1xf32> to vector<1x8x1xf32>
      tpu.vector_store %arg13[%c1_60, %c0_61, %c0_62], %102 {strides = array<i32>} : memref<4x8x1xf32, #tpu.memory_space<vmem>>, vector<1x8x1xf32>,
      %103 = vector.extract_strided_slice %19 {offsets = [0, 16], sizes = [8, 8], strides = [1, 1]} : vector<8x64xf32> to vector<8x8xf32>
      %104 = vector.extract_strided_slice %19 {offsets = [0, 48], sizes = [8, 8], strides = [1, 1]} : vector<8x64xf32> to vector<8x8xf32>
      %c2 = arith.constant 2 : index
      %c0_63 = arith.constant 0 : index
      %c0_64 = arith.constant 0 : index
      %105 = vector.load %arg12[%c2, %c0_63, %c0_64] : memref<4x8x8xf32, #tpu.memory_space<vmem>>, vector<1x8x8xf32>
      %106 = vector.shape_cast %105 : vector<1x8x8xf32> to vector<8x8xf32>
      %cst_65 = arith.constant dense<0.000000e+00> : vector<8x8xf32>
      %107 = tpu.matmul %106, %103, %cst_65 {dimension_numbers = #tpu.dot_dimension_numbers<[1], [1], [0], [0], [0, 0, 1, 0], [], []>} : vector<8x8xf32>, vector<8x8xf32>, vector<8x8xf32> -> vector<8x8xf32>
      %cst_66 = arith.constant -1.000000e+30 : f32
      %108 = vector.broadcast %cst_66 : f32 to vector<8x8xf32>
      %109 = arith.select %26, %107, %108 : vector<8x8xi1>, vector<8x8xf32>
      %c2_67 = arith.constant 2 : index
      %c0_68 = arith.constant 0 : index
      %c0_69 = arith.constant 0 : index
      %110 = vector.load %arg13[%c2_67, %c0_68, %c0_69] : memref<4x8x1xf32, #tpu.memory_space<vmem>>, vector<1x8x1xf32>
      %111 = vector.shape_cast %110 : vector<1x8x1xf32> to vector<8x1xf32>
      %cst_70 = arith.constant dense<0xFF800000> : vector<8xf32>
      %112 = vector.multi_reduction <maximumf>, %109, %cst_70 [1] : vector<8x8xf32> to vector<8xf32>
      %113 = vector.shape_cast %112 : vector<8xf32> to vector<8x1xf32>
      %114 = arith.maximumf %111, %113 : vector<8x1xf32>
      %115 = arith.subf %111, %114 : vector<8x1xf32>
      %116 = math.exp %115 : vector<8x1xf32>
      %117 = vector.broadcast %114 : vector<8x1xf32> to vector<8x8xf32>
      %118 = arith.subf %109, %117 : vector<8x8xf32>
      %119 = math.exp %118 : vector<8x8xf32>
      %c2_71 = arith.constant 2 : index
      %c0_72 = arith.constant 0 : index
      %c0_73 = arith.constant 0 : index
      %120 = vector.load %arg14[%c2_71, %c0_72, %c0_73] : memref<4x8x1xf32, #tpu.memory_space<vmem>>, vector<1x8x1xf32>
      %121 = vector.shape_cast %120 : vector<1x8x1xf32> to vector<8x1xf32>
      %122 = arith.mulf %116, %121 : vector<8x1xf32>
      %cst_74 = arith.constant dense<0.000000e+00> : vector<8xf32>
      %123 = vector.multi_reduction <add>, %119, %cst_74 [1] : vector<8x8xf32> to vector<8xf32>
      %124 = vector.shape_cast %123 : vector<8xf32> to vector<8x1xf32>
      %125 = arith.addf %122, %124 : vector<8x1xf32>
      %c2_75 = arith.constant 2 : index
      %c0_76 = arith.constant 0 : index
      %c0_77 = arith.constant 0 : index
      %126 = vector.load %arg14[%c2_75, %c0_76, %c0_77] : memref<4x8x1xf32, #tpu.memory_space<vmem>>, vector<1x8x1xf32>
      %127 = vector.shape_cast %126 : vector<1x8x1xf32> to vector<8x1xf32>
      %128 = vector.shape_cast %125 : vector<8x1xf32> to vector<1x8x1xf32>
      tpu.vector_store %arg14[%c2_75, %c0_76, %c0_77], %128 {strides = array<i32>} : memref<4x8x1xf32, #tpu.memory_space<vmem>>, vector<1x8x1xf32>,
      %c2_78 = arith.constant 2 : index
      %c0_79 = arith.constant 0 : index
      %c0_80 = arith.constant 0 : index
      %129 = vector.load %arg15[%c2_78, %c0_79, %c0_80] : memref<4x8x8xf32, #tpu.memory_space<vmem>>, vector<1x8x8xf32>
      %130 = vector.shape_cast %129 : vector<1x8x8xf32> to vector<8x8xf32>
      %131 = vector.broadcast %116 : vector<8x1xf32> to vector<8x8xf32>
      %132 = arith.mulf %131, %130 : vector<8x8xf32>
      %cst_81 = arith.constant dense<0.000000e+00> : vector<8x8xf32>
      %133 = tpu.matmul %119, %104, %cst_81 {dimension_numbers = #tpu.dot_dimension_numbers<[1], [0], [0], [1], [0, 0, 1, 1], [], []>} : vector<8x8xf32>, vector<8x8xf32>, vector<8x8xf32> -> vector<8x8xf32>
      %134 = arith.addf %132, %133 : vector<8x8xf32>
      %c2_82 = arith.constant 2 : index
      %c0_83 = arith.constant 0 : index
      %c0_84 = arith.constant 0 : index
      %135 = vector.load %arg15[%c2_82, %c0_83, %c0_84] : memref<4x8x8xf32, #tpu.memory_space<vmem>>, vector<1x8x8xf32>
      %136 = vector.shape_cast %135 : vector<1x8x8xf32> to vector<8x8xf32>
      %137 = vector.shape_cast %134 : vector<8x8xf32> to vector<1x8x8xf32>
      tpu.vector_store %arg15[%c2_82, %c0_83, %c0_84], %137 {strides = array<i32>} : memref<4x8x8xf32, #tpu.memory_space<vmem>>, vector<1x8x8xf32>,
      %c2_85 = arith.constant 2 : index
      %c0_86 = arith.constant 0 : index
      %c0_87 = arith.constant 0 : index
      %138 = vector.load %arg13[%c2_85, %c0_86, %c0_87] : memref<4x8x1xf32, #tpu.memory_space<vmem>>, vector<1x8x1xf32>
      %139 = vector.shape_cast %138 : vector<1x8x1xf32> to vector<8x1xf32>
      %140 = vector.shape_cast %114 : vector<8x1xf32> to vector<1x8x1xf32>
      tpu.vector_store %arg13[%c2_85, %c0_86, %c0_87], %140 {strides = array<i32>} : memref<4x8x1xf32, #tpu.memory_space<vmem>>, vector<1x8x1xf32>,
      %141 = vector.extract_strided_slice %19 {offsets = [0, 24], sizes = [8, 8], strides = [1, 1]} : vector<8x64xf32> to vector<8x8xf32>
      %142 = vector.extract_strided_slice %19 {offsets = [0, 56], sizes = [8, 8], strides = [1, 1]} : vector<8x64xf32> to vector<8x8xf32>
      %c3 = arith.constant 3 : index
      %c0_88 = arith.constant 0 : index
      %c0_89 = arith.constant 0 : index
      %143 = vector.load %arg12[%c3, %c0_88, %c0_89] : memref<4x8x8xf32, #tpu.memory_space<vmem>>, vector<1x8x8xf32>
      %144 = vector.shape_cast %143 : vector<1x8x8xf32> to vector<8x8xf32>
      %cst_90 = arith.constant dense<0.000000e+00> : vector<8x8xf32>
      %145 = tpu.matmul %144, %141, %cst_90 {dimension_numbers = #tpu.dot_dimension_numbers<[1], [1], [0], [0], [0, 0, 1, 0], [], []>} : vector<8x8xf32>, vector<8x8xf32>, vector<8x8xf32> -> vector<8x8xf32>
      %cst_91 = arith.constant -1.000000e+30 : f32
      %146 = vector.broadcast %cst_91 : f32 to vector<8x8xf32>
      %147 = arith.select %26, %145, %146 : vector<8x8xi1>, vector<8x8xf32>
      %c3_92 = arith.constant 3 : index
      %c0_93 = arith.constant 0 : index
      %c0_94 = arith.constant 0 : index
      %148 = vector.load %arg13[%c3_92, %c0_93, %c0_94] : memref<4x8x1xf32, #tpu.memory_space<vmem>>, vector<1x8x1xf32>
      %149 = vector.shape_cast %148 : vector<1x8x1xf32> to vector<8x1xf32>
      %cst_95 = arith.constant dense<0xFF800000> : vector<8xf32>
      %150 = vector.multi_reduction <maximumf>, %147, %cst_95 [1] : vector<8x8xf32> to vector<8xf32>
      %151 = vector.shape_cast %150 : vector<8xf32> to vector<8x1xf32>
      %152 = arith.maximumf %149, %151 : vector<8x1xf32>
      %153 = arith.subf %149, %152 : vector<8x1xf32>
      %154 = math.exp %153 : vector<8x1xf32>
      %155 = vector.broadcast %152 : vector<8x1xf32> to vector<8x8xf32>
      %156 = arith.subf %147, %155 : vector<8x8xf32>
      %157 = math.exp %156 : vector<8x8xf32>
      %c3_96 = arith.constant 3 : index
      %c0_97 = arith.constant 0 : index
      %c0_98 = arith.constant 0 : index
      %158 = vector.load %arg14[%c3_96, %c0_97, %c0_98] : memref<4x8x1xf32, #tpu.memory_space<vmem>>, vector<1x8x1xf32>
      %159 = vector.shape_cast %158 : vector<1x8x1xf32> to vector<8x1xf32>
      %160 = arith.mulf %154, %159 : vector<8x1xf32>
      %cst_99 = arith.constant dense<0.000000e+00> : vector<8xf32>
      %161 = vector.multi_reduction <add>, %157, %cst_99 [1] : vector<8x8xf32> to vector<8xf32>
      %162 = vector.shape_cast %161 : vector<8xf32> to vector<8x1xf32>
      %163 = arith.addf %160, %162 : vector<8x1xf32>
      %c3_100 = arith.constant 3 : index
      %c0_101 = arith.constant 0 : index
      %c0_102 = arith.constant 0 : index
      %164 = vector.load %arg14[%c3_100, %c0_101, %c0_102] : memref<4x8x1xf32, #tpu.memory_space<vmem>>, vector<1x8x1xf32>
      %165 = vector.shape_cast %164 : vector<1x8x1xf32> to vector<8x1xf32>
      %166 = vector.shape_cast %163 : vector<8x1xf32> to vector<1x8x1xf32>
      tpu.vector_store %arg14[%c3_100, %c0_101, %c0_102], %166 {strides = array<i32>} : memref<4x8x1xf32, #tpu.memory_space<vmem>>, vector<1x8x1xf32>,
      %c3_103 = arith.constant 3 : index
      %c0_104 = arith.constant 0 : index
      %c0_105 = arith.constant 0 : index
      %167 = vector.load %arg15[%c3_103, %c0_104, %c0_105] : memref<4x8x8xf32, #tpu.memory_space<vmem>>, vector<1x8x8xf32>
      %168 = vector.shape_cast %167 : vector<1x8x8xf32> to vector<8x8xf32>
      %169 = vector.broadcast %154 : vector<8x1xf32> to vector<8x8xf32>
      %170 = arith.mulf %169, %168 : vector<8x8xf32>
      %cst_106 = arith.constant dense<0.000000e+00> : vector<8x8xf32>
      %171 = tpu.matmul %157, %142, %cst_106 {dimension_numbers = #tpu.dot_dimension_numbers<[1], [0], [0], [1], [0, 0, 1, 1], [], []>} : vector<8x8xf32>, vector<8x8xf32>, vector<8x8xf32> -> vector<8x8xf32>
      %172 = arith.addf %170, %171 : vector<8x8xf32>
      %c3_107 = arith.constant 3 : index
      %c0_108 = arith.constant 0 : index
      %c0_109 = arith.constant 0 : index
      %173 = vector.load %arg15[%c3_107, %c0_108, %c0_109] : memref<4x8x8xf32, #tpu.memory_space<vmem>>, vector<1x8x8xf32>
      %174 = vector.shape_cast %173 : vector<1x8x8xf32> to vector<8x8xf32>
      %175 = vector.shape_cast %172 : vector<8x8xf32> to vector<1x8x8xf32>
      tpu.vector_store %arg15[%c3_107, %c0_108, %c0_109], %175 {strides = array<i32>} : memref<4x8x8xf32, #tpu.memory_space<vmem>>, vector<1x8x8xf32>,
      %c3_110 = arith.constant 3 : index
      %c0_111 = arith.constant 0 : index
      %c0_112 = arith.constant 0 : index
      %176 = vector.load %arg13[%c3_110, %c0_111, %c0_112] : memref<4x8x1xf32, #tpu.memory_space<vmem>>, vector<1x8x1xf32>
      %177 = vector.shape_cast %176 : vector<1x8x1xf32> to vector<8x1xf32>
      %178 = vector.shape_cast %152 : vector<8x1xf32> to vector<1x8x1xf32>
      tpu.vector_store %arg13[%c3_110, %c0_111, %c0_112], %178 {strides = array<i32>} : memref<4x8x1xf32, #tpu.memory_space<vmem>>, vector<1x8x1xf32>,
    } else {
    }
    %c0_i32_4 = arith.constant 0 : i32
    %10 = arith.cmpi eq, %arg2, %c0_i32_4 : i32
    %11 = arith.extui %10 : i1 to i32
    %c0_i32_5 = arith.constant 0 : i32
    %12 = arith.cmpi ne, %11, %c0_i32_5 : i32
    scf.if %12 {
      %cst = arith.constant 0.000000e+00 : f32
      %13 = vector.broadcast %cst : f32 to vector<8x32xf32>
      %c0 = arith.constant 0 : index
      %c0_6 = arith.constant 0 : index
      %c0_7 = arith.constant 0 : index
      %14 = vector.load %arg15[%c0, %c0_6, %c0_7] : memref<4x8x8xf32, #tpu.memory_space<vmem>>, vector<1x8x8xf32>
      %15 = vector.shape_cast %14 : vector<1x8x8xf32> to vector<8x8xf32>
      %c0_8 = arith.constant 0 : index
      %c0_9 = arith.constant 0 : index
      %c0_10 = arith.constant 0 : index
      %16 = vector.load %arg14[%c0_8, %c0_9, %c0_10] : memref<4x8x1xf32, #tpu.memory_space<vmem>>, vector<1x8x1xf32>
      %17 = vector.shape_cast %16 : vector<1x8x1xf32> to vector<8x1xf32>
      %18 = tpu.reciprocal %17 : vector<8x1xf32> -> vector<8x1xf32>
      %19 = vector.broadcast %18 : vector<8x1xf32> to vector<8x8xf32>
      %20 = arith.mulf %15, %19 : vector<8x8xf32>
      %c0_11 = arith.constant 0 : index
      %c0_12 = arith.constant 0 : index
      %21 = vector.load %arg9[%c0_11, %c0_12] : memref<32x32xf32, #tpu.memory_space<vmem>>, vector<8x32xf32>
      %cst_13 = arith.constant dense<0.000000e+00> : vector<8x32xf32>
      %22 = tpu.matmul %20, %21, %cst_13 {dimension_numbers = #tpu.dot_dimension_numbers<[1], [0], [0], [1], [0, 0, 1, 1], [], []>} : vector<8x8xf32>, vector<8x32xf32>, vector<8x32xf32> -> vector<8x32xf32>
      %23 = arith.addf %13, %22 : vector<8x32xf32>
      %c1 = arith.constant 1 : index
      %c0_14 = arith.constant 0 : index
      %c0_15 = arith.constant 0 : index
      %24 = vector.load %arg15[%c1, %c0_14, %c0_15] : memref<4x8x8xf32, #tpu.memory_space<vmem>>, vector<1x8x8xf32>
      %25 = vector.shape_cast %24 : vector<1x8x8xf32> to vector<8x8xf32>
      %c1_16 = arith.constant 1 : index
      %c0_17 = arith.constant 0 : index
      %c0_18 = arith.constant 0 : index
      %26 = vector.load %arg14[%c1_16, %c0_17, %c0_18] : memref<4x8x1xf32, #tpu.memory_space<vmem>>, vector<1x8x1xf32>
      %27 = vector.shape_cast %26 : vector<1x8x1xf32> to vector<8x1xf32>
      %28 = tpu.reciprocal %27 : vector<8x1xf32> -> vector<8x1xf32>
      %29 = vector.broadcast %28 : vector<8x1xf32> to vector<8x8xf32>
      %30 = arith.mulf %25, %29 : vector<8x8xf32>
      %c8 = arith.constant 8 : index
      %c0_19 = arith.constant 0 : index
      %31 = vector.load %arg9[%c8, %c0_19] : memref<32x32xf32, #tpu.memory_space<vmem>>, vector<8x32xf32>
      %cst_20 = arith.constant dense<0.000000e+00> : vector<8x32xf32>
      %32 = tpu.matmul %30, %31, %cst_20 {dimension_numbers = #tpu.dot_dimension_numbers<[1], [0], [0], [1], [0, 0, 1, 1], [], []>} : vector<8x8xf32>, vector<8x32xf32>, vector<8x32xf32> -> vector<8x32xf32>
      %33 = arith.addf %23, %32 : vector<8x32xf32>
      %c2 = arith.constant 2 : index
      %c0_21 = arith.constant 0 : index
      %c0_22 = arith.constant 0 : index
      %34 = vector.load %arg15[%c2, %c0_21, %c0_22] : memref<4x8x8xf32, #tpu.memory_space<vmem>>, vector<1x8x8xf32>
      %35 = vector.shape_cast %34 : vector<1x8x8xf32> to vector<8x8xf32>
      %c2_23 = arith.constant 2 : index
      %c0_24 = arith.constant 0 : index
      %c0_25 = arith.constant 0 : index
      %36 = vector.load %arg14[%c2_23, %c0_24, %c0_25] : memref<4x8x1xf32, #tpu.memory_space<vmem>>, vector<1x8x1xf32>
      %37 = vector.shape_cast %36 : vector<1x8x1xf32> to vector<8x1xf32>
      %38 = tpu.reciprocal %37 : vector<8x1xf32> -> vector<8x1xf32>
      %39 = vector.broadcast %38 : vector<8x1xf32> to vector<8x8xf32>
      %40 = arith.mulf %35, %39 : vector<8x8xf32>
      %c16 = arith.constant 16 : index
      %c0_26 = arith.constant 0 : index
      %41 = vector.load %arg9[%c16, %c0_26] : memref<32x32xf32, #tpu.memory_space<vmem>>, vector<8x32xf32>
      %cst_27 = arith.constant dense<0.000000e+00> : vector<8x32xf32>
      %42 = tpu.matmul %40, %41, %cst_27 {dimension_numbers = #tpu.dot_dimension_numbers<[1], [0], [0], [1], [0, 0, 1, 1], [], []>} : vector<8x8xf32>, vector<8x32xf32>, vector<8x32xf32> -> vector<8x32xf32>
      %43 = arith.addf %33, %42 : vector<8x32xf32>
      %c3 = arith.constant 3 : index
      %c0_28 = arith.constant 0 : index
      %c0_29 = arith.constant 0 : index
      %44 = vector.load %arg15[%c3, %c0_28, %c0_29] : memref<4x8x8xf32, #tpu.memory_space<vmem>>, vector<1x8x8xf32>
      %45 = vector.shape_cast %44 : vector<1x8x8xf32> to vector<8x8xf32>
      %c3_30 = arith.constant 3 : index
      %c0_31 = arith.constant 0 : index
      %c0_32 = arith.constant 0 : index
      %46 = vector.load %arg14[%c3_30, %c0_31, %c0_32] : memref<4x8x1xf32, #tpu.memory_space<vmem>>, vector<1x8x1xf32>
      %47 = vector.shape_cast %46 : vector<1x8x1xf32> to vector<8x1xf32>
      %48 = tpu.reciprocal %47 : vector<8x1xf32> -> vector<8x1xf32>
      %49 = vector.broadcast %48 : vector<8x1xf32> to vector<8x8xf32>
      %50 = arith.mulf %45, %49 : vector<8x8xf32>
      %c24 = arith.constant 24 : index
      %c0_33 = arith.constant 0 : index
      %51 = vector.load %arg9[%c24, %c0_33] : memref<32x32xf32, #tpu.memory_space<vmem>>, vector<8x32xf32>
      %cst_34 = arith.constant dense<0.000000e+00> : vector<8x32xf32>
      %52 = tpu.matmul %50, %51, %cst_34 {dimension_numbers = #tpu.dot_dimension_numbers<[1], [0], [0], [1], [0, 0, 1, 1], [], []>} : vector<8x8xf32>, vector<8x32xf32>, vector<8x32xf32> -> vector<8x32xf32>
      %53 = arith.addf %43, %52 : vector<8x32xf32>
      %c0_35 = arith.constant 0 : index
      %c0_36 = arith.constant 0 : index
      %54 = vector.load %arg10[%c0_35, %c0_36] : memref<1x32xf32, #tpu.memory_space<vmem>>, vector<1x32xf32>
      %55 = vector.broadcast %54 : vector<1x32xf32> to vector<8x32xf32>
      %56 = arith.addf %53, %55 : vector<8x32xf32>
      %c0_37 = arith.constant 0 : index
      %c0_38 = arith.constant 0 : index
      %c0_39 = arith.constant 0 : index
      %57 = vector.load %arg11[%c0_37, %c0_38, %c0_39] : memref<1x8x32xf32, #tpu.memory_space<vmem>>, vector<1x8x32xf32>
      %58 = vector.shape_cast %57 : vector<1x8x32xf32> to vector<8x32xf32>
      %59 = vector.shape_cast %56 : vector<8x32xf32> to vector<1x8x32xf32>
      tpu.vector_store %arg11[%c0_37, %c0_38, %c0_39], %59 {strides = array<i32>} : memref<1x8x32xf32, #tpu.memory_space<vmem>>, vector<1x8x32xf32>,
    } else {
    }
    return
  }
  func.func @transform_0(%arg0: i32, %arg1: i32, %arg2: i32) -> (i32, i32, i32) {
    %c0_i32 = arith.constant 0 : i32
    %c0_i32_0 = arith.constant 0 : i32
    return %arg0, %arg1, %c0_i32 : i32, i32, i32
  }
  func.func @transform_1(%arg0: i32, %arg1: i32, %arg2: i32) -> (i32, i32, i32) {
    %c0_i32 = arith.constant 0 : i32
    %c0_i32_0 = arith.constant 0 : i32
    return %arg0, %arg2, %c0_i32 : i32, i32, i32
  }
  func.func @transform_2(%arg0: i32, %arg1: i32, %arg2: i32) -> (i32, i32) {
    %c0_i32 = arith.constant 0 : i32
    %c0_i32_0 = arith.constant 0 : i32
    %c0_i32_1 = arith.constant 0 : i32
    return %c0_i32, %c0_i32_0 : i32, i32
  }
  func.func @transform_3(%arg0: i32, %arg1: i32, %arg2: i32) -> (i32, i32) {
    %c0_i32 = arith.constant 0 : i32
    %c0_i32_0 = arith.constant 0 : i32
    %c0_i32_1 = arith.constant 0 : i32
    return %c0_i32, %c0_i32_0 : i32, i32
  }
  func.func @transform_4(%arg0: i32, %arg1: i32, %arg2: i32) -> (i32, i32) {
    %c0_i32 = arith.constant 0 : i32
    %c0_i32_0 = arith.constant 0 : i32
    %c0_i32_1 = arith.constant 0 : i32
    return %c0_i32, %c0_i32_0 : i32, i32
  }
  func.func @transform_5(%arg0: i32, %arg1: i32, %arg2: i32) -> (i32, i32) {
    %c0_i32 = arith.constant 0 : i32
    %c0_i32_0 = arith.constant 0 : i32
    %c0_i32_1 = arith.constant 0 : i32
    return %c0_i32, %c0_i32_0 : i32, i32
  }
  func.func @transform_6(%arg0: i32, %arg1: i32, %arg2: i32) -> (i32, i32) {
    %c0_i32 = arith.constant 0 : i32
    %c0_i32_0 = arith.constant 0 : i32
    %c0_i32_1 = arith.constant 0 : i32
    return %c0_i32, %c0_i32_0 : i32, i32
  }
  func.func @transform_7(%arg0: i32, %arg1: i32, %arg2: i32) -> (i32, i32) {
    %c0_i32 = arith.constant 0 : i32
    %c0_i32_0 = arith.constant 0 : i32
    %c0_i32_1 = arith.constant 0 : i32
    return %c0_i32, %c0_i32_0 : i32, i32
  }
  func.func @transform_8(%arg0: i32, %arg1: i32, %arg2: i32) -> (i32, i32, i32) {
    %c0_i32 = arith.constant 0 : i32
    %c0_i32_0 = arith.constant 0 : i32
    return %arg0, %arg1, %c0_i32 : i32, i32, i32
  }
}

</mosaic_0001>

<llo_original>
// kernel: tpu_custom_call.1
$region0: #{tpu_custom_call.1}
  #allocation0 [shape = 'u32[]', space=smem, size = 0x4, offset = 0x4, fixed_abs, tag = 'smem constant byte address 0x4 - core index']
  #allocation1 [shape = 'u32[72,128]{1,0:T(1,128)}', space=vmem, size = 0x9000, scoped, tag = 'internal scratch']
  #allocation2 [shape = 'f32[4,8,8]{2,1,0:T(8,128)}', space=vmem, size = 0x4000, scoped, tag = 'scratch operand']
  #allocation3 [shape = 'f32[4,8,1]{2,1,0:T(8,128)}', space=vmem, size = 0x4000, scoped, tag = 'scratch operand']
  #allocation4 [shape = 'f32[4,8,1]{2,1,0:T(8,128)}', space=vmem, size = 0x4000, scoped, tag = 'scratch operand']
  #allocation5 [shape = 'f32[4,8,8]{2,1,0:T(8,128)}', space=vmem, size = 0x4000, scoped, tag = 'scratch operand']
  %s0 = inlined_call_operand.hbm [shape: f32[2,8,32], index: 0, kind: input, shape index: {}]
  %s1 = inlined_call_operand.hbm [shape: f32[2,8,32], index: 1, kind: input, shape index: {}]
  %s2 = inlined_call_operand.hbm [shape: f32[32,32], index: 2, kind: input, shape index: {}]
  %s3 = inlined_call_operand.vmem [shape: f32[1,32], index: 3, kind: input, shape index: {}]
  %s4 = inlined_call_operand.hbm [shape: f32[32,64], index: 4, kind: input, shape index: {}]
  %s5 = inlined_call_operand.vmem [shape: f32[1,64], index: 5, kind: input, shape index: {}]
  %s6 = inlined_call_operand.hbm [shape: f32[32,32], index: 6, kind: input, shape index: {}]
  %s7 = inlined_call_operand.vmem [shape: f32[1,32], index: 7, kind: input, shape index: {}]
  %s8 = inlined_call_operand.hbm [shape: f32[2,8,32], index: 8, kind: output, shape index: {}]
  %s9 = sld [smem:[#allocation0]]
  $region97: #{tpu_custom_call.1} parent=0
    _
  %s11 = ssub.s32 1, %s9
  %s12 = scalar_select 0, %s11, %s9
  $region1: #{tpu_custom_call.1} parent=0
    #allocation6 [shape = 'u8[8192]{0}', space=vmem, size = 0x2000, scoped, tag = 'input window, operand 0']
    #allocation7 [shape = 's32[2]{0}', space=sflag, size = 0x8, scoped, tag = 'scoped memory for tpu_custom_call.1']
    #allocation8 [shape = 's32[2]{0}', space=sflag, size = 0x8, scoped, tag = 'scoped memory for tpu_custom_call.1']
    #allocation9 [shape = 'u8[8192]{0}', space=vmem, size = 0x2000, scoped, tag = 'input window, operand 1']
    #allocation10 [shape = 's32[2]{0}', space=sflag, size = 0x8, scoped, tag = 'scoped memory for tpu_custom_call.1']
    #allocation11 [shape = 'u8[16384]{0}', space=vmem, size = 0x4000, scoped, tag = 'input window, operand 2, single buffered']
    #allocation12 [shape = 'u8[16384]{0}', space=vmem, size = 0x4000, scoped, tag = 'input window, operand 4, single buffered']
    #allocation13 [shape = 's32[1]{0}', space=sflag, size = 0x4, scoped, tag = 'scoped memory for tpu_custom_call.1']
    #allocation14 [shape = 'u8[16384]{0}', space=vmem, size = 0x4000, scoped, tag = 'input window, operand 6, single buffered']
    #allocation15 [shape = 'u8[8192]{0}', space=vmem, size = 0x2000, scoped, tag = 'output window, operand 0']
    %13 = vsyncpa [#allocation7], 0
    %s14 = scalar_lea.sflag [#allocation7], 1
    %15 = vsyncpa %s14, 0
    %16 = vsyncpa [#allocation10], 0
    %s17 = scalar_lea.sflag [#allocation10], 1
    %18 = vsyncpa %s17, 0
    %19 = vsyncpa [#allocation13], 0
    %20 = vsyncpa [#allocation8], 0
    %s21 = scalar_lea.sflag [#allocation8], 1
    %22 = vsyncpa %s21, 0
    loop: start=0, step=1, limit=4
    $region2: #{tpu_custom_call.1} parent=1 // loop_pre_header
      _
    $region3: #{tpu_custom_call.1} parent=1 // loop_header
      %s24 = sphi 0, %s28
      %p25 = scmp.ge.s32.totalorder %s24, 4
      %s31 = sphi 0, %s50
      %s32 = sphi 0, %s46
      %s33 = sphi 0, %s42
      %s34 = sphi 0, %s31
      %s35 = sphi 0, %s32
      %s36 = sphi 0, %s33
      %s37 = sphi 0, %s34
      %s38 = sphi 0, %s35
      %s39 = sphi 0, %s36
      %s55 = sphi 0, %s57
      %s58 = sphi 0, %s55
      %s59 = sphi 0, %s58
      %s75 = sphi 0, %s59
      %s83 = sphi 0, %s85
      %s86 = sphi 0, %s83
      %s87 = sphi 0, %s86
      %s103 = sphi 0, %s87
      %s107 = sphi 0, %s107
      %s109 = sphi 0, %s107
      %s110 = sphi 0, %s109
      %s124 = sphi 0, %s110
      %s128 = sphi 0, %s128
      %s130 = sphi 0, %s128
      %s131 = sphi 0, %s130
      %s145 = sphi 0, %s131
      %s149 = sphi 0, %s149
      %s151 = sphi 0, %s149
      %s152 = sphi 0, %s151
      %s166 = sphi 0, %s152
      %s170 = sphi 0, %s170
      %s172 = sphi 0, %s170
      %s173 = sphi 0, %s172
      %s187 = sphi 0, %s173
      %s191 = sphi 0, %s191
      %s193 = sphi 0, %s191
      %s194 = sphi 0, %s193
      %s208 = sphi 0, %s194
      %s212 = sphi 0, %s212
      %s214 = sphi 0, %s212
      %s215 = sphi 0, %s214
      %s229 = sphi 0, %s215
      %s237 = sphi 0, %s239
      %s240 = sphi 0, %s237
      %s241 = sphi 0, %s240
      %s257 = sphi 0, %s241
    $region4: #{tpu_custom_call.1} parent=1 // loop_header_branch
      %27 = sbr.rel (%p25) target = $region8
    $region5: #{tpu_custom_call.1} parent=1 // loop_body
      %s29 = ssub.s32 %s24, 1
      %s30 = ssub.s32 %s24, 2
      %s40 = sadd.s32 1, %s33
      %p41 = scmp.ge.s32.totalorder %s40, 1
      %s42 = scalar_select %p41, 0, %s40
      %s43 = sadd.s32 1, %s32
      %s44 = scalar_select %p41, %s43, %s32
      %p45 = scmp.ge.s32.totalorder %s44, 1
      %s46 = scalar_select %p45, 0, %s44
      %s47 = sadd.s32 1, %s31
      %s48 = scalar_select %p45, %s47, %s31
      %p49 = scmp.ge.s32.totalorder %s48, 2
      %s50 = scalar_select %p49, 0, %s48
      %s51 = ssub.s32 %s31, %s50
      %s52 = ssub.s32 %s32, %s46
      %s53 = sor.u32 %s51, %s52
      %p54 = scmp.eq.s32.totalorder %s53, 0
      %s56 = sadd.s32 %s55, 1
      %s57 = scalar_select %p54, %s55, %s56
      %p60 = pneg %p54
      %p61 = scmp.eq.s32.totalorder %s24, 1
      %p62 = por %p60, %p61
      %p63 = scmp.ne.s32.totalorder %s55, %s58
      %p64 = scmp.eq.s32.totalorder %s24, 0
      %p65 = por %p63, %p64
      %p66 = scmp.ne.s32.totalorder %s55, %s58
      %p67 = scmp.eq.s32.totalorder %s29, 1
      %p68 = por %p66, %p67
      %p69 = scmp.ne.s32.totalorder %s58, %s59
      %p70 = scmp.eq.s32.totalorder %s29, 0
      %p71 = por %p69, %p70
      %p72 = scmp.ne.s32.totalorder %s58, %s59
      %p73 = scmp.eq.s32.totalorder %s30, 1
      %p74 = por %p72, %p73
      %p76 = scmp.ne.s32.totalorder %s59, %s75
      %p77 = scmp.eq.s32.totalorder %s30, 0
      %p78 = por %p76, %p77
      %s79 = ssub.s32 %s31, %s50
      %s80 = ssub.s32 %s33, %s42
      %s81 = sor.u32 %s79, %s80
      %p82 = scmp.eq.s32.totalorder %s81, 0
      %s84 = sadd.s32 %s83, 1
      %s85 = scalar_select %p82, %s83, %s84
      %p88 = pneg %p82
      %p89 = scmp.eq.s32.totalorder %s24, 1
      %p90 = por %p88, %p89
      %p91 = scmp.ne.s32.totalorder %s83, %s86
      %p92 = scmp.eq.s32.totalorder %s24, 0
      %p93 = por %p91, %p92
      %p94 = scmp.ne.s32.totalorder %s83, %s86
      %p95 = scmp.eq.s32.totalorder %s29, 1
      %p96 = por %p94, %p95
      %p97 = scmp.ne.s32.totalorder %s86, %s87
      %p98 = scmp.eq.s32.totalorder %s29, 0
      %p99 = por %p97, %p98
      %p100 = scmp.ne.s32.totalorder %s86, %s87
      %p101 = scmp.eq.s32.totalorder %s30, 1
      %p102 = por %p100, %p101
      %p104 = scmp.ne.s32.totalorder %s87, %s103
      %p105 = scmp.eq.s32.totalorder %s30, 0
      %p106 = por %p104, %p105
      %s108 = sadd.s32 %s107, 1
      %p111 = scmp.eq.s32.totalorder %s24, 1
      %p112 = scmp.ne.s32.totalorder %s107, %s109
      %p113 = scmp.eq.s32.totalorder %s24, 0
      %p114 = por %p112, %p113
      %p115 = scmp.ne.s32.totalorder %s107, %s109
      %p116 = scmp.eq.s32.totalorder %s29, 1
      %p117 = por %p115, %p116
      %p118 = scmp.ne.s32.totalorder %s109, %s110
      %p119 = scmp.eq.s32.totalorder %s29, 0
      %p120 = por %p118, %p119
      %p121 = scmp.ne.s32.totalorder %s109, %s110
      %p122 = scmp.eq.s32.totalorder %s30, 1
      %p123 = por %p121, %p122
      %p125 = scmp.ne.s32.totalorder %s110, %s124
      %p126 = scmp.eq.s32.totalorder %s30, 0
      %p127 = por %p125, %p126
      %s129 = sadd.s32 %s128, 1
      %p132 = scmp.eq.s32.totalorder %s24, 1
      %p133 = scmp.ne.s32.totalorder %s128, %s130
      %p134 = scmp.eq.s32.totalorder %s24, 0
      %p135 = por %p133, %p134
      %p136 = scmp.ne.s32.totalorder %s128, %s130
      %p137 = scmp.eq.s32.totalorder %s29, 1
      %p138 = por %p136, %p137
      %p139 = scmp.ne.s32.totalorder %s130, %s131
      %p140 = scmp.eq.s32.totalorder %s29, 0
      %p141 = por %p139, %p140
      %p142 = scmp.ne.s32.totalorder %s130, %s131
      %p143 = scmp.eq.s32.totalorder %s30, 1
      %p144 = por %p142, %p143
      %p146 = scmp.ne.s32.totalorder %s131, %s145
      %p147 = scmp.eq.s32.totalorder %s30, 0
      %p148 = por %p146, %p147
      %s150 = sadd.s32 %s149, 1
      %p153 = scmp.eq.s32.totalorder %s24, 1
      %p154 = scmp.ne.s32.totalorder %s149, %s151
      %p155 = scmp.eq.s32.totalorder %s24, 0
      %p156 = por %p154, %p155
      %p157 = scmp.ne.s32.totalorder %s149, %s151
      %p158 = scmp.eq.s32.totalorder %s29, 1
      %p159 = por %p157, %p158
      %p160 = scmp.ne.s32.totalorder %s151, %s152
      %p161 = scmp.eq.s32.totalorder %s29, 0
      %p162 = por %p160, %p161
      %p163 = scmp.ne.s32.totalorder %s151, %s152
      %p164 = scmp.eq.s32.totalorder %s30, 1
      %p165 = por %p163, %p164
      %p167 = scmp.ne.s32.totalorder %s152, %s166
      %p168 = scmp.eq.s32.totalorder %s30, 0
      %p169 = por %p167, %p168
      %s171 = sadd.s32 %s170, 1
      %p174 = scmp.eq.s32.totalorder %s24, 1
      %p175 = scmp.ne.s32.totalorder %s170, %s172
      %p176 = scmp.eq.s32.totalorder %s24, 0
      %p177 = por %p175, %p176
      %p178 = scmp.ne.s32.totalorder %s170, %s172
      %p179 = scmp.eq.s32.totalorder %s29, 1
      %p180 = por %p178, %p179
      %p181 = scmp.ne.s32.totalorder %s172, %s173
      %p182 = scmp.eq.s32.totalorder %s29, 0
      %p183 = por %p181, %p182
      %p184 = scmp.ne.s32.totalorder %s172, %s173
      %p185 = scmp.eq.s32.totalorder %s30, 1
      %p186 = por %p184, %p185
      %p188 = scmp.ne.s32.totalorder %s173, %s187
      %p189 = scmp.eq.s32.totalorder %s30, 0
      %p190 = por %p188, %p189
      %s192 = sadd.s32 %s191, 1
      %p195 = scmp.eq.s32.totalorder %s24, 1
      %p196 = scmp.ne.s32.totalorder %s191, %s193
      %p197 = scmp.eq.s32.totalorder %s24, 0
      %p198 = por %p196, %p197
      %p199 = scmp.ne.s32.totalorder %s191, %s193
      %p200 = scmp.eq.s32.totalorder %s29, 1
      %p201 = por %p199, %p200
      %p202 = scmp.ne.s32.totalorder %s193, %s194
      %p203 = scmp.eq.s32.totalorder %s29, 0
      %p204 = por %p202, %p203
      %p205 = scmp.ne.s32.totalorder %s193, %s194
      %p206 = scmp.eq.s32.totalorder %s30, 1
      %p207 = por %p205, %p206
      %p209 = scmp.ne.s32.totalorder %s194, %s208
      %p210 = scmp.eq.s32.totalorder %s30, 0
      %p211 = por %p209, %p210
      %s213 = sadd.s32 %s212, 1
      %p216 = scmp.eq.s32.totalorder %s24, 1
      %p217 = scmp.ne.s32.totalorder %s212, %s214
      %p218 = scmp.eq.s32.totalorder %s24, 0
      %p219 = por %p217, %p218
      %p220 = scmp.ne.s32.totalorder %s212, %s214
      %p221 = scmp.eq.s32.totalorder %s29, 1
      %p222 = por %p220, %p221
      %p223 = scmp.ne.s32.totalorder %s214, %s215
      %p224 = scmp.eq.s32.totalorder %s29, 0
      %p225 = por %p223, %p224
      %p226 = scmp.ne.s32.totalorder %s214, %s215
      %p227 = scmp.eq.s32.totalorder %s30, 1
      %p228 = por %p226, %p227
      %p230 = scmp.ne.s32.totalorder %s215, %s229
      %p231 = scmp.eq.s32.totalorder %s30, 0
      %p232 = por %p230, %p231
      %s233 = ssub.s32 %s31, %s50
      %s234 = ssub.s32 %s32, %s46
      %s235 = sor.u32 %s233, %s234
      %p236 = scmp.eq.s32.totalorder %s235, 0
      %s238 = sadd.s32 %s237, 1
      %s239 = scalar_select %p236, %s237, %s238
      %p242 = pneg %p236
      %p243 = scmp.eq.s32.totalorder %s24, 1
      %p244 = por %p242, %p243
      %p245 = scmp.ne.s32.totalorder %s237, %s240
      %p246 = scmp.eq.s32.totalorder %s24, 0
      %p247 = por %p245, %p246
      %p248 = scmp.ne.s32.totalorder %s237, %s240
      %p249 = scmp.eq.s32.totalorder %s29, 1
      %p250 = por %p248, %p249
      %p251 = scmp.ne.s32.totalorder %s240, %s241
      %p252 = scmp.eq.s32.totalorder %s29, 0
      %p253 = por %p251, %p252
      %p254 = scmp.ne.s32.totalorder %s240, %s241
      %p255 = scmp.eq.s32.totalorder %s30, 1
      %p256 = por %p254, %p255
      %p258 = scmp.ne.s32.totalorder %s241, %s257
      %p259 = scmp.eq.s32.totalorder %s30, 0
      %p260 = por %p258, %p259
      %p261 = scmp.le.s32.totalorder 1, %s24
      %p262 = scmp.lt.s32.totalorder %s24, 3
      %p263 = pnand %p261, %p262
      %p264 = pneg %p263
      // Predicated region
      $region9: #{tpu_custom_call.1} parent=5 // pred_check
        _
      $region10: #{tpu_custom_call.1} parent=5 // pred_check_branch
        %266 = sbr.rel (%p263) target = $region12
      $region11: #{tpu_custom_call.1} parent=5 // pred_region
        %s267 = ssub.s32 %s24, 1
        // Predicated region
        $region13: #{tpu_custom_call.1} parent=11 // pred_check
          %p268 = pneg %p120
        $region14: #{tpu_custom_call.1} parent=11 // pred_check_branch
          %270 = sbr.rel (%p268) target = $region16
        $region15: #{tpu_custom_call.1} parent=11 // pred_region
          %272 = vsyncadd [#allocation10], 0
          %s273 = sshll.u32 %s2, 4
          %s274 = int_to_ptr.hbm [resolvable:$true] %s273
          %s275 = sshll.u32 [#allocation11], 4
          %s276 = int_to_ptr.vmem [resolvable:$true] %s275
          %281 = dma.hbm_to_vmem [thread:$0]  %s274, 512, %s276, [#allocation10], 128, 128, 8
        $region16: #{tpu_custom_call.1} parent=11 // pred_fallthru
          _
        // Predicated region
        $region17: #{tpu_custom_call.1} parent=11 // pred_check
          %p282 = pneg %p141
        $region18: #{tpu_custom_call.1} parent=11 // pred_check_branch
          %284 = sbr.rel (%p282) target = $region20
        $region19: #{tpu_custom_call.1} parent=11 // pred_region
          _
        $region20: #{tpu_custom_call.1} parent=11 // pred_fallthru
          _
        // Predicated region
        $region21: #{tpu_custom_call.1} parent=11 // pred_check
          %p285 = pneg %p162
        $region22: #{tpu_custom_call.1} parent=11 // pred_check_branch
          %287 = sbr.rel (%p285) target = $region24
        $region23: #{tpu_custom_call.1} parent=11 // pred_region
          %289 = vsyncadd [#allocation13], 0
          %s290 = sshll.u32 %s4, 4
          %s291 = int_to_ptr.hbm [resolvable:$true] %s290
          %s292 = sshll.u32 [#allocation12], 4
          %s293 = int_to_ptr.vmem [resolvable:$true] %s292
          %298 = dma.hbm_to_vmem [thread:$0]  %s291, 512, %s293, [#allocation13], 128, 128, 8
        $region24: #{tpu_custom_call.1} parent=11 // pred_fallthru
          _
        // Predicated region
        $region25: #{tpu_custom_call.1} parent=11 // pred_check
          %p299 = pneg %p183
        $region26: #{tpu_custom_call.1} parent=11 // pred_check_branch
          %301 = sbr.rel (%p299) target = $region28
        $region27: #{tpu_custom_call.1} parent=11 // pred_region
          _
        $region28: #{tpu_custom_call.1} parent=11 // pred_fallthru
          _
        // Predicated region
        $region29: #{tpu_custom_call.1} parent=11 // pred_check
          %p302 = pneg %p204
        $region30: #{tpu_custom_call.1} parent=11 // pred_check_branch
          %304 = sbr.rel (%p302) target = $region32
        $region31: #{tpu_custom_call.1} parent=11 // pred_region
          %306 = vsyncadd [#allocation13], 0
          %s307 = sshll.u32 %s6, 4
          %s308 = int_to_ptr.hbm [resolvable:$true] %s307
          %s309 = sshll.u32 [#allocation14], 4
          %s310 = int_to_ptr.vmem [resolvable:$true] %s309
          %315 = dma.hbm_to_vmem [thread:$0]  %s308, 512, %s310, [#allocation13], 128, 128, 8
        $region32: #{tpu_custom_call.1} parent=11 // pred_fallthru
          _
        // Predicated region
        $region33: #{tpu_custom_call.1} parent=11 // pred_check
          %p316 = pneg %p225
        $region34: #{tpu_custom_call.1} parent=11 // pred_check_branch
          %318 = sbr.rel (%p316) target = $region36
        $region35: #{tpu_custom_call.1} parent=11 // pred_region
          _
        $region36: #{tpu_custom_call.1} parent=11 // pred_fallthru
          _
      $region12: #{tpu_custom_call.1} parent=5 // pred_fallthru
        _
      %p319 = scmp.lt.s32.totalorder %s24, 2
      // Predicated region
      $region37: #{tpu_custom_call.1} parent=5 // pred_check
        %p320 = pneg %p319
      $region38: #{tpu_custom_call.1} parent=5 // pred_check_branch
        %322 = sbr.rel (%p320) target = $region40
      $region39: #{tpu_custom_call.1} parent=5 // pred_region
        // Predicated region
        $region41: #{tpu_custom_call.1} parent=39 // pred_check
          %p323 = pneg %p65
        $region42: #{tpu_custom_call.1} parent=39 // pred_check_branch
          %325 = sbr.rel (%p323) target = $region44
        $region43: #{tpu_custom_call.1} parent=39 // pred_region
          %s326 = sand.u32 %s55, 1
          %s327 = scalar_lea.sflag [#allocation7], %s326
          %s328 = sand.u32 %s55, 1
          %s329 = smul.addr %s328, 8
          %s330 = scalar_lea.vmem [#allocation6], %s329
          %332 = vsyncadd %s327, 0
          %s333 = sadd.s32 %s32, %s31
          %s334 = smul.addr %s333, 8
          %s335 = scalar_lea.hbm %s0, %s334
          %s337 = sshll.u32 %s335, 4
          %s338 = int_to_ptr.hbm [resolvable:$true] %s337
          %s339 = sshll.u32 %s330, 4
          %s340 = int_to_ptr.vmem [resolvable:$true] %s339
          %342 = dma.hbm_to_vmem [thread:$0]  %s338, 128, %s340, %s327
        $region44: #{tpu_custom_call.1} parent=39 // pred_fallthru
          _
        // Predicated region
        $region45: #{tpu_custom_call.1} parent=39 // pred_check
          %p343 = pneg %p93
        $region46: #{tpu_custom_call.1} parent=39 // pred_check_branch
          %345 = sbr.rel (%p343) target = $region48
        $region47: #{tpu_custom_call.1} parent=39 // pred_region
          %s346 = sand.u32 %s24, 1
          %s347 = scalar_lea.sflag [#allocation10], %s346
          %s348 = sand.u32 %s83, 1
          %s349 = smul.addr %s348, 8
          %s350 = scalar_lea.vmem [#allocation9], %s349
          %352 = vsyncadd %s347, 0
          %s353 = sadd.s32 %s33, %s31
          %s354 = smul.addr %s353, 8
          %s355 = scalar_lea.hbm %s1, %s354
          %s357 = sshll.u32 %s355, 4
          %s358 = int_to_ptr.hbm [resolvable:$true] %s357
          %s359 = sshll.u32 %s350, 4
          %s360 = int_to_ptr.vmem [resolvable:$true] %s359
          %362 = dma.hbm_to_vmem [thread:$0]  %s358, 128, %s360, %s347
        $region48: #{tpu_custom_call.1} parent=39 // pred_fallthru
          _
      $region40: #{tpu_custom_call.1} parent=5 // pred_fallthru
        _
      %p363 = scmp.le.s32.totalorder 1, %s24
      %p364 = scmp.lt.s32.totalorder %s24, 3
      %p365 = pnand %p363, %p364
      %p366 = pneg %p365
      // Predicated region
      $region49: #{tpu_custom_call.1} parent=5 // pred_check
        _
      $region50: #{tpu_custom_call.1} parent=5 // pred_check_branch
        %368 = sbr.rel (%p365) target = $region52
      $region51: #{tpu_custom_call.1} parent=5 // pred_region
        %s369 = ssub.s32 %s24, 1
        %s370 = sand.u32 %s58, 1
        %s371 = scalar_lea.sflag [#allocation7], %s370
        %s372 = sand.u32 %s58, 1
        %s373 = smul.addr %s372, 8
        %s374 = scalar_lea.vmem [#allocation6], %s373
        // Predicated region
        $region53: #{tpu_custom_call.1} parent=51 // pred_check
          %p375 = pneg %p71
        $region54: #{tpu_custom_call.1} parent=51 // pred_check_branch
          %377 = sbr.rel (%p375) target = $region56
        $region55: #{tpu_custom_call.1} parent=51 // pred_region
          %379 = dma.done %s371, 128
        $region56: #{tpu_custom_call.1} parent=51 // pred_fallthru
          _
        %s380 = sand.u32 %s29, 1
        %s381 = scalar_lea.sflag [#allocation10], %s380
        %s382 = sand.u32 %s86, 1
        %s383 = smul.addr %s382, 8
        %s384 = scalar_lea.vmem [#allocation9], %s383
        // Predicated region
        $region57: #{tpu_custom_call.1} parent=51 // pred_check
          %p385 = pneg %p99
        $region58: #{tpu_custom_call.1} parent=51 // pred_check_branch
          %387 = sbr.rel (%p385) target = $region60
        $region59: #{tpu_custom_call.1} parent=51 // pred_region
          %389 = dma.done %s381, 128
        $region60: #{tpu_custom_call.1} parent=51 // pred_fallthru
          _
        // Predicated region
        $region61: #{tpu_custom_call.1} parent=51 // pred_check
          %p390 = pneg %p120
        $region62: #{tpu_custom_call.1} parent=51 // pred_check_branch
          %392 = sbr.rel (%p390) target = $region64
        $region63: #{tpu_custom_call.1} parent=51 // pred_region
          %394 = dma.done [#allocation10], 512
        $region64: #{tpu_custom_call.1} parent=51 // pred_fallthru
          _
        // Predicated region
        $region65: #{tpu_custom_call.1} parent=51 // pred_check
          %p395 = pneg %p162
        $region66: #{tpu_custom_call.1} parent=51 // pred_check_branch
          %397 = sbr.rel (%p395) target = $region68
        $region67: #{tpu_custom_call.1} parent=51 // pred_region
          %399 = dma.done [#allocation13], 512
        $region68: #{tpu_custom_call.1} parent=51 // pred_fallthru
          _
        // Predicated region
        $region69: #{tpu_custom_call.1} parent=51 // pred_check
          %p400 = pneg %p204
        $region70: #{tpu_custom_call.1} parent=51 // pred_check_branch
          %402 = sbr.rel (%p400) target = $region72
        $region71: #{tpu_custom_call.1} parent=51 // pred_region
          %404 = dma.done [#allocation13], 512
        $region72: #{tpu_custom_call.1} parent=51 // pred_fallthru
          _
        %s405 = sand.u32 %s58, 1
        %s406 = scalar_lea.sflag [#allocation7], %s405
        %s407 = sand.u32 %s58, 1
        %s408 = smul.addr %s407, 8
        %s409 = scalar_lea.vmem [#allocation6], %s408
        %p410 = pneg %p71
        %p411 = pneg %p68
        %s412 = sand.u32 %s29, 1
        %s413 = scalar_lea.sflag [#allocation10], %s412
        %s414 = sand.u32 %s86, 1
        %s415 = smul.addr %s414, 8
        %s416 = scalar_lea.vmem [#allocation9], %s415
        %p417 = pneg %p99
        %p418 = pneg %p96
        %p419 = pneg %p120
        %p420 = pneg %p117
        %p421 = pneg %p141
        %p422 = pneg %p138
        %p423 = pneg %p162
        %p424 = pneg %p159
        %p425 = pneg %p183
        %p426 = pneg %p180
        %p427 = pneg %p204
        %p428 = pneg %p201
        %p429 = pneg %p225
        %p430 = pneg %p222
        %p431 = pneg %p253
        %p432 = pneg %p250
        %s433 = sand.u32 %s240, 1
        %s434 = scalar_lea.sflag [#allocation8], %s433
        %s435 = sand.u32 %s240, 1
        %s436 = smul.addr %s435, 8
        %s437 = scalar_lea.vmem [#allocation15], %s436
        %s438 = smul.u32 %s35, 8
        %s439 = smul.u32 %s36, 8
        %p440 = scmp.eq.s32.totalorder %s36, 0
        // Predicated region
        $region73: #{tpu_custom_call.1} parent=51 // pred_check
          %p441 = pneg %p440
        $region74: #{tpu_custom_call.1} parent=51 // pred_check_branch
          %443 = sbr.rel (%p441) target = $region76
        $region75: #{tpu_custom_call.1} parent=51 // pred_region
          %v444 = vld [vmem:[%s374] sm:$0xff]
          %v445 = vld [vmem:[#allocation11] sm:$0xff]
          %v446 = vld [vmem:[#allocation11 + $0x8] sm:$0xff]
          %v447 = vld [vmem:[#allocation11 + $0x10] sm:$0xff]
          %v448 = vld [vmem:[#allocation11 + $0x18] sm:$0xff]
          %v449 = vld [vmem:[%s3] sm:$0x1]
          %v451 = vperm.slane %v449, 0
          %vm453 = vcmask 261120
          %v455 = vsel %vm453, %v444, 0
          %457 = vmatpush.msra.mxu0 0.0
          %458 = vmatpush.msra.mxu0 0.0
          %459 = vmatpush.msra.mxu0 0.0
          %460 = vmatpush.msra.mxu0 0.0
          %461 = vmatpush.msra.mxu0 0.0
          %462 = vmatpush.msra.mxu0 0.0
          %463 = vmatpush.msra.mxu0 0.0
          %464 = vmatpush.msra.mxu0 0.0
          %465 = vmatpush.msra.mxu0 0.0
          %466 = vmatpush.msra.mxu0 0.0
          %467 = vmatpush.msra.mxu0 0.0
          %468 = vmatpush.msra.mxu0 0.0
          %469 = vmatpush.msra.mxu0 %v448
          %470 = vmatpush.msra.mxu0 %v447
          %471 = vmatpush.msra.mxu0 %v446
          %472 = vmatpush.msra.mxu0 %v445
          %473 = vmatmul.f32.gmra.mxu0 %v455
          %v474 = vpop.f32.mrf.mxu0
          %v475 = vadd.f32 %v451, %v474
          %476 = vdwg.mxu0
          %vm477 = vcmask 64512
          %478 = vst.msk [vmem:[#allocation2] sm:$0xff] %vm477, %v475
          %480 = vrot.lane.b32.xlu0 %v475, 120
          %v481 = vpop.permute.xlu0 %480
          %s483 = scalar_lea.vmem [#allocation2], 8
          %484 = vst.msk [vmem:[%s483] sm:$0xff] %vm477, %v481
          %485 = vrot.lane.b32.xlu0 %v475, 112
          %v486 = vpop.permute.xlu0 %485
          %s488 = scalar_lea.vmem [#allocation2], 16
          %489 = vst.msk [vmem:[%s488] sm:$0xff] %vm477, %v486
          %490 = vrot.lane.b32.xlu0 %v475, 104
          %v491 = vpop.permute.xlu0 %490
          %s493 = scalar_lea.vmem [#allocation2], 24
          %494 = vst.msk [vmem:[%s493] sm:$0xff] %vm477, %v491
          %vm495 = vcmask 7168
          %496 = vst.msk [vmem:[#allocation3] sm:$0xff] %vm495, -1e+30
          %497 = vst.msk [vmem:[#allocation3 + $0x8] sm:$0xff] %vm495, -1e+30
          %498 = vst.msk [vmem:[#allocation3 + $0x10] sm:$0xff] %vm495, -1e+30
          %499 = vst.msk [vmem:[#allocation3 + $0x18] sm:$0xff] %vm495, -1e+30
          %500 = vst.msk [vmem:[#allocation4] sm:$0xff] %vm495, 0.0
          %501 = vst.msk [vmem:[#allocation4 + $0x8] sm:$0xff] %vm495, 0.0
          %502 = vst.msk [vmem:[#allocation4 + $0x10] sm:$0xff] %vm495, 0.0
          %503 = vst.msk [vmem:[#allocation4 + $0x18] sm:$0xff] %vm495, 0.0
          %504 = vst.msk [vmem:[#allocation5] sm:$0xff] %vm477, 0.0
          %505 = vst.msk [vmem:[#allocation5 + $0x8] sm:$0xff] %vm477, 0.0
          %506 = vst.msk [vmem:[#allocation5 + $0x10] sm:$0xff] %vm477, 0.0
          %507 = vst.msk [vmem:[#allocation5 + $0x18] sm:$0xff] %vm477, 0.0
        $region76: #{tpu_custom_call.1} parent=51 // pred_fallthru
          _
        %s508 = sadd.s32 %s438, 7
        %p509 = scmp.le.s32.totalorder %s439, %s508
        // Predicated region
        $region77: #{tpu_custom_call.1} parent=51 // pred_check
          %p510 = pneg %p509
        $region78: #{tpu_custom_call.1} parent=51 // pred_check_branch
          %512 = sbr.rel (%p510) target = $region80
        $region79: #{tpu_custom_call.1} parent=51 // pred_region
          %v513 = vld [vmem:[%s384] sm:$0xff]
          %v514 = vld [vmem:[#allocation12] sm:$0xff]
          %v515 = vld [vmem:[#allocation12 + $0x8] sm:$0xff]
          %v516 = vld [vmem:[#allocation12 + $0x10] sm:$0xff]
          %v517 = vld [vmem:[#allocation12 + $0x18] sm:$0xff]
          %v518 = vld [vmem:[%s5] sm:$0x1]
          %v520 = vperm.slane %v518, 0
          %vm522 = vcmask 261120
          %v524 = vsel %vm522, %v513, 0
          %526 = vmatpush.msra.mxu0 0.0
          %527 = vmatpush.msra.mxu0 0.0
          %528 = vmatpush.msra.mxu0 0.0
          %529 = vmatpush.msra.mxu0 0.0
          %530 = vmatpush.msra.mxu0 0.0
          %531 = vmatpush.msra.mxu0 0.0
          %532 = vmatpush.msra.mxu0 0.0
          %533 = vmatpush.msra.mxu0 0.0
          %534 = vmatpush.msra.mxu0 0.0
          %535 = vmatpush.msra.mxu0 0.0
          %536 = vmatpush.msra.mxu0 0.0
          %537 = vmatpush.msra.mxu0 0.0
          %538 = vmatpush.msra.mxu0 %v517
          %539 = vmatpush.msra.mxu0 %v516
          %540 = vmatpush.msra.mxu0 %v515
          %541 = vmatpush.msra.mxu0 %v514
          %542 = vmatmul.f32.gmra.mxu0 %v524
          %v543 = vpop.f32.mrf.mxu0
          %v544 = vadd.f32 %v520, %v543
          %545 = vdwg.mxu0
          %v546 = vlaneseq
          %v547 = vshrl.u32 %v546, 7
          %v548 = vstv %s438
          %v549 = vadd.s32 %v548, %v547
          %v550 = vlaneseq
          %v551 = vand.u32 %v550, 127
          %v552 = vstv %s439
          %v553 = vadd.s32 %v552, %v551
          %vm554 = vcmp.le.s32.totalorder %v553, %v549
          %v555 = vld [vmem:[#allocation2] sm:$0xff]
          %vm556 = vcmask 64512
          %v558 = vsel %vm556, %v555, 0
          %v561 = vsel %vm556, %v544, 0
          %563 = vmatpush.xpose.msra.mxu0 0.0
          %564 = vmatpush.xpose.msra.mxu0 0.0
          %565 = vmatpush.xpose.msra.mxu0 0.0
          %566 = vmatpush.xpose.msra.mxu0 0.0
          %567 = vmatpush.xpose.msra.mxu0 0.0
          %568 = vmatpush.xpose.msra.mxu0 0.0
          %569 = vmatpush.xpose.msra.mxu0 0.0
          %570 = vmatpush.xpose.msra.mxu0 0.0
          %571 = vmatpush.xpose.msra.mxu0 0.0
          %572 = vmatpush.xpose.msra.mxu0 0.0
          %573 = vmatpush.xpose.msra.mxu0 0.0
          %574 = vmatpush.xpose.msra.mxu0 0.0
          %575 = vmatpush.xpose.msra.mxu0 0.0
          %576 = vmatpush.xpose.msra.mxu0 0.0
          %577 = vmatpush.xpose.msra.mxu0 0.0
          %578 = vmatpush.xpose.msra.mxu0 %v561
          %579 = vmatmul.f32.gmra.mxu0 %v558
          %v580 = vpop.f32.mrf.mxu0
          %v581 = vadd.f32 0.0, %v580
          %582 = vdwg.mxu0
          %v583 = vsel %vm554, %v581, -1e+30
          %v584 = vld [vmem:[#allocation3] sm:$0xff]
          %v585 = vsel %vm556, %v583, -inf
          %586 = vmax.xlane.f32.xlu0 %v585
          %v587 = vpop.xlane.xlu0 %586
          %v588 = vmax.f32 %v584, %v587
          %v589 = vsub.f32 %v584, %v588
          %v590 = vmul.f32 %v589, 1.442695
          %v591 = vpow.pop %v590
          %593 = vset.pattern.permute.xlu0 0
          %594 = vperm.xlu0 %593, %v588
          %v595 = vpop.permute.xlu0 %594
          %v597 = vsub.f32 %v583, %v595
          %v598 = vmul.f32 %v597, 1.442695
          %v599 = vpow.pop %v598
          %v600 = vld [vmem:[#allocation4] sm:$0xff]
          %v601 = vmul.f32 %v591, %v600
          %v602 = vsel %vm556, %v599, 0.0
          %603 = vadd.xlane.f32.xlu0 %v602
          %v604 = vpop.xlane.xlu0 %603
          %v605 = vadd.f32 %v601, %v604
          %vm606 = vcmask 7168
          %607 = vst.msk [vmem:[#allocation4] sm:$0xff] %vm606, %v605
          %v608 = vld [vmem:[#allocation5] sm:$0xff]
          %610 = vset.pattern.permute.xlu0 0
          %611 = vperm.xlu0 %610, %v591
          %v612 = vpop.permute.xlu0 %611
          %v614 = vmul.f32 %v612, %v608
          %615 = vrot.lane.b32.xlu0 %v544, 96
          %v616 = vpop.permute.xlu0 %615
          %v619 = vsel %vm556, %v599, 0
          %621 = vmatpush.msra.mxu0 0.0
          %622 = vmatpush.msra.mxu0 0.0
          %623 = vmatpush.msra.mxu0 0.0
          %624 = vmatpush.msra.mxu0 0.0
          %625 = vmatpush.msra.mxu0 0.0
          %626 = vmatpush.msra.mxu0 0.0
          %627 = vmatpush.msra.mxu0 0.0
          %628 = vmatpush.msra.mxu0 0.0
          %629 = vmatpush.msra.mxu0 0.0
          %630 = vmatpush.msra.mxu0 0.0
          %631 = vmatpush.msra.mxu0 0.0
          %632 = vmatpush.msra.mxu0 0.0
          %633 = vmatpush.msra.mxu0 0.0
          %634 = vmatpush.msra.mxu0 0.0
          %635 = vmatpush.msra.mxu0 0.0
          %636 = vmatpush.msra.mxu0 %v616
          %637 = vmatmul.f32.gmra.mxu0 %v619
          %v638 = vpop.f32.mrf.mxu0
          %v639 = vadd.f32 0.0, %v638
          %640 = vdwg.mxu0
          %v641 = vadd.f32 %v614, %v639
          %642 = vst.msk [vmem:[#allocation5] sm:$0xff] %vm556, %v641
          %643 = vst.msk [vmem:[#allocation3] sm:$0xff] %vm606, %v588
          %s644 = scalar_lea.vmem [#allocation2], 8
          %v645 = vld [vmem:[%s644] sm:$0xff]
          %646 = vrot.lane.b32.xlu0 %v544, 120
          %v647 = vpop.permute.xlu0 %646
          %v649 = vsel %vm556, %v645, 0
          %v651 = vsel %vm556, %v647, 0
          %653 = vmatpush.xpose.msra.mxu0 0.0
          %654 = vmatpush.xpose.msra.mxu0 0.0
          %655 = vmatpush.xpose.msra.mxu0 0.0
          %656 = vmatpush.xpose.msra.mxu0 0.0
          %657 = vmatpush.xpose.msra.mxu0 0.0
          %658 = vmatpush.xpose.msra.mxu0 0.0
          %659 = vmatpush.xpose.msra.mxu0 0.0
          %660 = vmatpush.xpose.msra.mxu0 0.0
          %661 = vmatpush.xpose.msra.mxu0 0.0
          %662 = vmatpush.xpose.msra.mxu0 0.0
          %663 = vmatpush.xpose.msra.mxu0 0.0
          %664 = vmatpush.xpose.msra.mxu0 0.0
          %665 = vmatpush.xpose.msra.mxu0 0.0
          %666 = vmatpush.xpose.msra.mxu0 0.0
          %667 = vmatpush.xpose.msra.mxu0 0.0
          %668 = vmatpush.xpose.msra.mxu0 %v651
          %669 = vmatmul.f32.gmra.mxu0 %v649
          %v670 = vpop.f32.mrf.mxu0
          %v671 = vadd.f32 0.0, %v670
          %672 = vdwg.mxu0
          %v673 = vsel %vm554, %v671, -1e+30
          %s674 = scalar_lea.vmem [#allocation3], 8
          %v675 = vld [vmem:[%s674] sm:$0xff]
          %v676 = vsel %vm556, %v673, -inf
          %677 = vmax.xlane.f32.xlu0 %v676
          %v678 = vpop.xlane.xlu0 %677
          %v679 = vmax.f32 %v675, %v678
          %v680 = vsub.f32 %v675, %v679
          %v681 = vmul.f32 %v680, 1.442695
          %v682 = vpow.pop %v681
          %684 = vset.pattern.permute.xlu0 0
          %685 = vperm.xlu0 %684, %v679
          %v686 = vpop.permute.xlu0 %685
          %v688 = vsub.f32 %v673, %v686
          %v689 = vmul.f32 %v688, 1.442695
          %v690 = vpow.pop %v689
          %s691 = scalar_lea.vmem [#allocation4], 8
          %v692 = vld [vmem:[%s691] sm:$0xff]
          %v693 = vmul.f32 %v682, %v692
          %v694 = vsel %vm556, %v690, 0.0
          %695 = vadd.xlane.f32.xlu0 %v694
          %v696 = vpop.xlane.xlu0 %695
          %v697 = vadd.f32 %v693, %v696
          %698 = vst.msk [vmem:[%s691] sm:$0xff] %vm606, %v697
          %s699 = scalar_lea.vmem [#allocation5], 8
          %v700 = vld [vmem:[%s699] sm:$0xff]
          %702 = vset.pattern.permute.xlu0 0
          %703 = vperm.xlu0 %702, %v682
          %v704 = vpop.permute.xlu0 %703
          %v706 = vmul.f32 %v704, %v700
          %707 = vrot.lane.b32.xlu0 %v544, 88
          %v708 = vpop.permute.xlu0 %707
          %v711 = vsel %vm556, %v690, 0
          %713 = vmatpush.msra.mxu0 0.0
          %714 = vmatpush.msra.mxu0 0.0
          %715 = vmatpush.msra.mxu0 0.0
          %716 = vmatpush.msra.mxu0 0.0
          %717 = vmatpush.msra.mxu0 0.0
          %718 = vmatpush.msra.mxu0 0.0
          %719 = vmatpush.msra.mxu0 0.0
          %720 = vmatpush.msra.mxu0 0.0
          %721 = vmatpush.msra.mxu0 0.0
          %722 = vmatpush.msra.mxu0 0.0
          %723 = vmatpush.msra.mxu0 0.0
          %724 = vmatpush.msra.mxu0 0.0
          %725 = vmatpush.msra.mxu0 0.0
          %726 = vmatpush.msra.mxu0 0.0
          %727 = vmatpush.msra.mxu0 0.0
          %728 = vmatpush.msra.mxu0 %v708
          %729 = vmatmul.f32.gmra.mxu0 %v711
          %v730 = vpop.f32.mrf.mxu0
          %v731 = vadd.f32 0.0, %v730
          %732 = vdwg.mxu0
          %v733 = vadd.f32 %v706, %v731
          %734 = vst.msk [vmem:[%s699] sm:$0xff] %vm556, %v733
          %735 = vst.msk [vmem:[%s674] sm:$0xff] %vm606, %v679
          %s736 = scalar_lea.vmem [#allocation2], 16
          %v737 = vld [vmem:[%s736] sm:$0xff]
          %738 = vrot.lane.b32.xlu0 %v544, 112
          %v739 = vpop.permute.xlu0 %738
          %v741 = vsel %vm556, %v737, 0
          %v743 = vsel %vm556, %v739, 0
          %745 = vmatpush.xpose.msra.mxu0 0.0
          %746 = vmatpush.xpose.msra.mxu0 0.0
          %747 = vmatpush.xpose.msra.mxu0 0.0
          %748 = vmatpush.xpose.msra.mxu0 0.0
          %749 = vmatpush.xpose.msra.mxu0 0.0
          %750 = vmatpush.xpose.msra.mxu0 0.0
          %751 = vmatpush.xpose.msra.mxu0 0.0
          %752 = vmatpush.xpose.msra.mxu0 0.0
          %753 = vmatpush.xpose.msra.mxu0 0.0
          %754 = vmatpush.xpose.msra.mxu0 0.0
          %755 = vmatpush.xpose.msra.mxu0 0.0
          %756 = vmatpush.xpose.msra.mxu0 0.0
          %757 = vmatpush.xpose.msra.mxu0 0.0
          %758 = vmatpush.xpose.msra.mxu0 0.0
          %759 = vmatpush.xpose.msra.mxu0 0.0
          %760 = vmatpush.xpose.msra.mxu0 %v743
          %761 = vmatmul.f32.gmra.mxu0 %v741
          %v762 = vpop.f32.mrf.mxu0
          %v763 = vadd.f32 0.0, %v762
          %764 = vdwg.mxu0
          %v765 = vsel %vm554, %v763, -1e+30
          %s766 = scalar_lea.vmem [#allocation3], 16
          %v767 = vld [vmem:[%s766] sm:$0xff]
          %v768 = vsel %vm556, %v765, -inf
          %769 = vmax.xlane.f32.xlu0 %v768
          %v770 = vpop.xlane.xlu0 %769
          %v771 = vmax.f32 %v767, %v770
          %v772 = vsub.f32 %v767, %v771
          %v773 = vmul.f32 %v772, 1.442695
          %v774 = vpow.pop %v773
          %776 = vset.pattern.permute.xlu0 0
          %777 = vperm.xlu0 %776, %v771
          %v778 = vpop.permute.xlu0 %777
          %v780 = vsub.f32 %v765, %v778
          %v781 = vmul.f32 %v780, 1.442695
          %v782 = vpow.pop %v781
          %s783 = scalar_lea.vmem [#allocation4], 16
          %v784 = vld [vmem:[%s783] sm:$0xff]
          %v785 = vmul.f32 %v774, %v784
          %v786 = vsel %vm556, %v782, 0.0
          %787 = vadd.xlane.f32.xlu0 %v786
          %v788 = vpop.xlane.xlu0 %787
          %v789 = vadd.f32 %v785, %v788
          %790 = vst.msk [vmem:[%s783] sm:$0xff] %vm606, %v789
          %s791 = scalar_lea.vmem [#allocation5], 16
          %v792 = vld [vmem:[%s791] sm:$0xff]
          %794 = vset.pattern.permute.xlu0 0
          %795 = vperm.xlu0 %794, %v774
          %v796 = vpop.permute.xlu0 %795
          %v798 = vmul.f32 %v796, %v792
          %799 = vrot.lane.b32.xlu0 %v544, 80
          %v800 = vpop.permute.xlu0 %799
          %v803 = vsel %vm556, %v782, 0
          %805 = vmatpush.msra.mxu0 0.0
          %806 = vmatpush.msra.mxu0 0.0
          %807 = vmatpush.msra.mxu0 0.0
          %808 = vmatpush.msra.mxu0 0.0
          %809 = vmatpush.msra.mxu0 0.0
          %810 = vmatpush.msra.mxu0 0.0
          %811 = vmatpush.msra.mxu0 0.0
          %812 = vmatpush.msra.mxu0 0.0
          %813 = vmatpush.msra.mxu0 0.0
          %814 = vmatpush.msra.mxu0 0.0
          %815 = vmatpush.msra.mxu0 0.0
          %816 = vmatpush.msra.mxu0 0.0
          %817 = vmatpush.msra.mxu0 0.0
          %818 = vmatpush.msra.mxu0 0.0
          %819 = vmatpush.msra.mxu0 0.0
          %820 = vmatpush.msra.mxu0 %v800
          %821 = vmatmul.f32.gmra.mxu0 %v803
          %v822 = vpop.f32.mrf.mxu0
          %v823 = vadd.f32 0.0, %v822
          %824 = vdwg.mxu0
          %v825 = vadd.f32 %v798, %v823
          %826 = vst.msk [vmem:[%s791] sm:$0xff] %vm556, %v825
          %827 = vst.msk [vmem:[%s766] sm:$0xff] %vm606, %v771
          %s828 = scalar_lea.vmem [#allocation2], 24
          %v829 = vld [vmem:[%s828] sm:$0xff]
          %830 = vrot.lane.b32.xlu0 %v544, 104
          %v831 = vpop.permute.xlu0 %830
          %v833 = vsel %vm556, %v829, 0
          %v835 = vsel %vm556, %v831, 0
          %837 = vmatpush.xpose.msra.mxu0 0.0
          %838 = vmatpush.xpose.msra.mxu0 0.0
          %839 = vmatpush.xpose.msra.mxu0 0.0
          %840 = vmatpush.xpose.msra.mxu0 0.0
          %841 = vmatpush.xpose.msra.mxu0 0.0
          %842 = vmatpush.xpose.msra.mxu0 0.0
          %843 = vmatpush.xpose.msra.mxu0 0.0
          %844 = vmatpush.xpose.msra.mxu0 0.0
          %845 = vmatpush.xpose.msra.mxu0 0.0
          %846 = vmatpush.xpose.msra.mxu0 0.0
          %847 = vmatpush.xpose.msra.mxu0 0.0
          %848 = vmatpush.xpose.msra.mxu0 0.0
          %849 = vmatpush.xpose.msra.mxu0 0.0
          %850 = vmatpush.xpose.msra.mxu0 0.0
          %851 = vmatpush.xpose.msra.mxu0 0.0
          %852 = vmatpush.xpose.msra.mxu0 %v835
          %853 = vmatmul.f32.gmra.mxu0 %v833
          %v854 = vpop.f32.mrf.mxu0
          %v855 = vadd.f32 0.0, %v854
          %856 = vdwg.mxu0
          %v857 = vsel %vm554, %v855, -1e+30
          %s858 = scalar_lea.vmem [#allocation3], 24
          %v859 = vld [vmem:[%s858] sm:$0xff]
          %v860 = vsel %vm556, %v857, -inf
          %861 = vmax.xlane.f32.xlu0 %v860
          %v862 = vpop.xlane.xlu0 %861
          %v863 = vmax.f32 %v859, %v862
          %v864 = vsub.f32 %v859, %v863
          %v865 = vmul.f32 %v864, 1.442695
          %v866 = vpow.pop %v865
          %868 = vset.pattern.permute.xlu0 0
          %869 = vperm.xlu0 %868, %v863
          %v870 = vpop.permute.xlu0 %869
          %v872 = vsub.f32 %v857, %v870
          %v873 = vmul.f32 %v872, 1.442695
          %v874 = vpow.pop %v873
          %s875 = scalar_lea.vmem [#allocation4], 24
          %v876 = vld [vmem:[%s875] sm:$0xff]
          %v877 = vmul.f32 %v866, %v876
          %v878 = vsel %vm556, %v874, 0.0
          %879 = vadd.xlane.f32.xlu0 %v878
          %v880 = vpop.xlane.xlu0 %879
          %v881 = vadd.f32 %v877, %v880
          %882 = vst.msk [vmem:[%s875] sm:$0xff] %vm606, %v881
          %s883 = scalar_lea.vmem [#allocation5], 24
          %v884 = vld [vmem:[%s883] sm:$0xff]
          %886 = vset.pattern.permute.xlu0 0
          %887 = vperm.xlu0 %886, %v866
          %v888 = vpop.permute.xlu0 %887
          %v890 = vmul.f32 %v888, %v884
          %891 = vrot.lane.b32.xlu0 %v544, 72
          %v892 = vpop.permute.xlu0 %891
          %v895 = vsel %vm556, %v874, 0
          %897 = vmatpush.msra.mxu0 0.0
          %898 = vmatpush.msra.mxu0 0.0
          %899 = vmatpush.msra.mxu0 0.0
          %900 = vmatpush.msra.mxu0 0.0
          %901 = vmatpush.msra.mxu0 0.0
          %902 = vmatpush.msra.mxu0 0.0
          %903 = vmatpush.msra.mxu0 0.0
          %904 = vmatpush.msra.mxu0 0.0
          %905 = vmatpush.msra.mxu0 0.0
          %906 = vmatpush.msra.mxu0 0.0
          %907 = vmatpush.msra.mxu0 0.0
          %908 = vmatpush.msra.mxu0 0.0
          %909 = vmatpush.msra.mxu0 0.0
          %910 = vmatpush.msra.mxu0 0.0
          %911 = vmatpush.msra.mxu0 0.0
          %912 = vmatpush.msra.mxu0 %v892
          %913 = vmatmul.f32.gmra.mxu0 %v895
          %v914 = vpop.f32.mrf.mxu0
          %v915 = vadd.f32 0.0, %v914
          %916 = vdwg.mxu0
          %v917 = vadd.f32 %v890, %v915
          %918 = vst.msk [vmem:[%s883] sm:$0xff] %vm556, %v917
          %919 = vst.msk [vmem:[%s858] sm:$0xff] %vm606, %v863
        $region80: #{tpu_custom_call.1} parent=51 // pred_fallthru
          _
        // Predicated region
        $region81: #{tpu_custom_call.1} parent=51 // pred_check
          %p920 = pneg %p440
        $region82: #{tpu_custom_call.1} parent=51 // pred_check_branch
          %922 = sbr.rel (%p920) target = $region84
        $region83: #{tpu_custom_call.1} parent=51 // pred_region
          %v923 = vld [vmem:[#allocation5] sm:$0xff]
          %v924 = vld [vmem:[#allocation4] sm:$0xff]
          %v925 = vrcp.pop %v924
          %v926 = vmul.f32 %v924, %v925
          %v927 = vsub.f32 1.0, %v926
          %v928 = vmul.f32 %v925, %v927
          %v929 = vadd.f32 %v925, %v928
          %vm930 = vweird.f32 %v924
          %vm931 = vweird.f32 %v925
          %vm932 = vmor %vm930, %vm931
          %v933 = vsel %vm932, %v925, %v929
          %v934 = vand.u32 2147483647, %v924
          %vm935 = vcmp.eq.f32.partialorder %v934, 8.507059e+37
          %v936 = vand.u32 %v924, 2147483648
          %v937 = vor.u32 1.1754944e-38, %v936
          %v938 = vsel %vm935, %v937, %v933
          %940 = vset.pattern.permute.xlu0 0
          %941 = vperm.xlu0 %940, %v938
          %v942 = vpop.permute.xlu0 %941
          %v944 = vmul.f32 %v923, %v942
          %v945 = vld [vmem:[#allocation14] sm:$0xff]
          %s946 = scalar_lea.vmem [#allocation5], 8
          %v947 = vld [vmem:[%s946] sm:$0xff]
          %s948 = scalar_lea.vmem [#allocation4], 8
          %v949 = vld [vmem:[%s948] sm:$0xff]
          %v950 = vrcp.pop %v949
          %v951 = vmul.f32 %v949, %v950
          %v952 = vsub.f32 1.0, %v951
          %v953 = vmul.f32 %v950, %v952
          %v954 = vadd.f32 %v950, %v953
          %vm955 = vweird.f32 %v949
          %vm956 = vweird.f32 %v950
          %vm957 = vmor %vm955, %vm956
          %v958 = vsel %vm957, %v950, %v954
          %v959 = vand.u32 2147483647, %v949
          %vm960 = vcmp.eq.f32.partialorder %v959, 8.507059e+37
          %v961 = vand.u32 %v949, 2147483648
          %v962 = vor.u32 1.1754944e-38, %v961
          %v963 = vsel %vm960, %v962, %v958
          %965 = vset.pattern.permute.xlu0 0
          %966 = vperm.xlu0 %965, %v963
          %v967 = vpop.permute.xlu0 %966
          %v969 = vmul.f32 %v947, %v967
          %v970 = vld [vmem:[#allocation14 + $0x8] sm:$0xff]
          %vm971 = vcmask 64512
          %v973 = vsel %vm971, %v969, 0
          %975 = vmatpush.msra.mxu0 0.0
          %976 = vmatpush.msra.mxu0 0.0
          %977 = vmatpush.msra.mxu0 0.0
          %978 = vmatpush.msra.mxu0 0.0
          %979 = vmatpush.msra.mxu0 0.0
          %980 = vmatpush.msra.mxu0 0.0
          %981 = vmatpush.msra.mxu0 0.0
          %982 = vmatpush.msra.mxu0 0.0
          %983 = vmatpush.msra.mxu0 0.0
          %984 = vmatpush.msra.mxu0 0.0
          %985 = vmatpush.msra.mxu0 0.0
          %986 = vmatpush.msra.mxu0 0.0
          %987 = vmatpush.msra.mxu0 0.0
          %988 = vmatpush.msra.mxu0 0.0
          %989 = vmatpush.msra.mxu0 0.0
          %990 = vmatpush.msra.mxu0 %v970
          %991 = vmatmul.f32.gmra.mxu0 %v973
          %v992 = vpop.f32.mrf.mxu0
          %v993 = vadd.f32 0.0, %v992
          %994 = vdwg.mxu0
          %v996 = vsel %vm971, %v944, 0
          %998 = vmatpush.msra.mxu0 0.0
          %999 = vmatpush.msra.mxu0 0.0
          %1000 = vmatpush.msra.mxu0 0.0
          %1001 = vmatpush.msra.mxu0 0.0
          %1002 = vmatpush.msra.mxu0 0.0
          %1003 = vmatpush.msra.mxu0 0.0
          %1004 = vmatpush.msra.mxu0 0.0
          %1005 = vmatpush.msra.mxu0 0.0
          %1006 = vmatpush.msra.mxu0 0.0
          %1007 = vmatpush.msra.mxu0 0.0
          %1008 = vmatpush.msra.mxu0 0.0
          %1009 = vmatpush.msra.mxu0 0.0
          %1010 = vmatpush.msra.mxu0 0.0
          %1011 = vmatpush.msra.mxu0 0.0
          %1012 = vmatpush.msra.mxu0 0.0
          %1013 = vmatpush.msra.mxu0 %v945
          %1014 = vmatmul.f32.gmra.mxu0 %v996
          %v1015 = vpop.f32.mrf.mxu0
          %v1016 = vadd.f32 %v993, %v1015
          %1017 = vdwg.mxu0
          %s1018 = scalar_lea.vmem [#allocation5], 16
          %v1019 = vld [vmem:[%s1018] sm:$0xff]
          %s1020 = scalar_lea.vmem [#allocation4], 16
          %v1021 = vld [vmem:[%s1020] sm:$0xff]
          %v1022 = vrcp.pop %v1021
          %v1023 = vmul.f32 %v1021, %v1022
          %v1024 = vsub.f32 1.0, %v1023
          %v1025 = vmul.f32 %v1022, %v1024
          %v1026 = vadd.f32 %v1022, %v1025
          %vm1027 = vweird.f32 %v1021
          %vm1028 = vweird.f32 %v1022
          %vm1029 = vmor %vm1027, %vm1028
          %v1030 = vsel %vm1029, %v1022, %v1026
          %v1031 = vand.u32 2147483647, %v1021
          %vm1032 = vcmp.eq.f32.partialorder %v1031, 8.507059e+37
          %v1033 = vand.u32 %v1021, 2147483648
          %v1034 = vor.u32 1.1754944e-38, %v1033
          %v1035 = vsel %vm1032, %v1034, %v1030
          %1037 = vset.pattern.permute.xlu0 0
          %1038 = vperm.xlu0 %1037, %v1035
          %v1039 = vpop.permute.xlu0 %1038
          %v1041 = vmul.f32 %v1019, %v1039
          %v1042 = vld [vmem:[#allocation14 + $0x10] sm:$0xff]
          %v1044 = vsel %vm971, %v1041, 0
          %1046 = vmatpush.msra.mxu0 0.0
          %1047 = vmatpush.msra.mxu0 0.0
          %1048 = vmatpush.msra.mxu0 0.0
          %1049 = vmatpush.msra.mxu0 0.0
          %1050 = vmatpush.msra.mxu0 0.0
          %1051 = vmatpush.msra.mxu0 0.0
          %1052 = vmatpush.msra.mxu0 0.0
          %1053 = vmatpush.msra.mxu0 0.0
          %1054 = vmatpush.msra.mxu0 0.0
          %1055 = vmatpush.msra.mxu0 0.0
          %1056 = vmatpush.msra.mxu0 0.0
          %1057 = vmatpush.msra.mxu0 0.0
          %1058 = vmatpush.msra.mxu0 0.0
          %1059 = vmatpush.msra.mxu0 0.0
          %1060 = vmatpush.msra.mxu0 0.0
          %1061 = vmatpush.msra.mxu0 %v1042
          %1062 = vmatmul.f32.gmra.mxu0 %v1044
          %v1063 = vpop.f32.mrf.mxu0
          %v1064 = vadd.f32 0.0, %v1063
          %1065 = vdwg.mxu0
          %v1066 = vadd.f32 %v1016, %v1064
          %s1067 = scalar_lea.vmem [#allocation5], 24
          %v1068 = vld [vmem:[%s1067] sm:$0xff]
          %s1069 = scalar_lea.vmem [#allocation4], 24
          %v1070 = vld [vmem:[%s1069] sm:$0xff]
          %v1071 = vrcp.pop %v1070
          %v1072 = vmul.f32 %v1070, %v1071
          %v1073 = vsub.f32 1.0, %v1072
          %v1074 = vmul.f32 %v1071, %v1073
          %v1075 = vadd.f32 %v1071, %v1074
          %vm1076 = vweird.f32 %v1070
          %vm1077 = vweird.f32 %v1071
          %vm1078 = vmor %vm1076, %vm1077
          %v1079 = vsel %vm1078, %v1071, %v1075
          %v1080 = vand.u32 2147483647, %v1070
          %vm1081 = vcmp.eq.f32.partialorder %v1080, 8.507059e+37
          %v1082 = vand.u32 %v1070, 2147483648
          %v1083 = vor.u32 1.1754944e-38, %v1082
          %v1084 = vsel %vm1081, %v1083, %v1079
          %1086 = vset.pattern.permute.xlu0 0
          %1087 = vperm.xlu0 %1086, %v1084
          %v1088 = vpop.permute.xlu0 %1087
          %v1090 = vmul.f32 %v1068, %v1088
          %v1091 = vld [vmem:[#allocation14 + $0x18] sm:$0xff]
          %v1093 = vsel %vm971, %v1090, 0
          %1095 = vmatpush.msra.mxu0 0.0
          %1096 = vmatpush.msra.mxu0 0.0
          %1097 = vmatpush.msra.mxu0 0.0
          %1098 = vmatpush.msra.mxu0 0.0
          %1099 = vmatpush.msra.mxu0 0.0
          %1100 = vmatpush.msra.mxu0 0.0
          %1101 = vmatpush.msra.mxu0 0.0
          %1102 = vmatpush.msra.mxu0 0.0
          %1103 = vmatpush.msra.mxu0 0.0
          %1104 = vmatpush.msra.mxu0 0.0
          %1105 = vmatpush.msra.mxu0 0.0
          %1106 = vmatpush.msra.mxu0 0.0
          %1107 = vmatpush.msra.mxu0 0.0
          %1108 = vmatpush.msra.mxu0 0.0
          %1109 = vmatpush.msra.mxu0 0.0
          %1110 = vmatpush.msra.mxu0 %v1091
          %1111 = vmatmul.f32.gmra.mxu0 %v1093
          %v1112 = vpop.f32.mrf.mxu0
          %v1113 = vadd.f32 0.0, %v1112
          %1114 = vdwg.mxu0
          %v1115 = vadd.f32 %v1066, %v1113
          %v1116 = vld [vmem:[%s7] sm:$0x1]
          %v1118 = vperm.slane %v1116, 0
          %v1120 = vadd.f32 %v1115, %v1118
          %vm1121 = vcmask 261120
          %1122 = vst.msk [vmem:[%s437] sm:$0xff] %vm1121, %v1120
        $region84: #{tpu_custom_call.1} parent=51 // pred_fallthru
          _
        %s1123 = sand.u32 %s240, 1
        %s1124 = scalar_lea.sflag [#allocation8], %s1123
        %s1125 = sand.u32 %s240, 1
        %s1126 = smul.addr %s1125, 8
        %s1127 = scalar_lea.vmem [#allocation15], %s1126
        // Predicated region
        $region85: #{tpu_custom_call.1} parent=51 // pred_check
          %p1128 = pneg %p250
        $region86: #{tpu_custom_call.1} parent=51 // pred_check_branch
          %1130 = sbr.rel (%p1128) target = $region88
        $region87: #{tpu_custom_call.1} parent=51 // pred_region
          %1132 = vsyncadd %s1124, 0
          %s1133 = sadd.s32 %s35, %s34
          %s1134 = smul.addr %s1133, 8
          %s1135 = scalar_lea.hbm %s8, %s1134
          %s1137 = sshll.u32 %s1127, 4
          %s1138 = int_to_ptr.vmem [resolvable:$true] %s1137
          %s1139 = sshll.u32 %s1135, 4
          %s1140 = int_to_ptr.hbm [resolvable:$true] %s1139
          %1142 = dma.vmem_to_hbm [thread:$0]  %s1138, 128, %s1140, %s1124
        $region88: #{tpu_custom_call.1} parent=51 // pred_fallthru
          _
      $region52: #{tpu_custom_call.1} parent=5 // pred_fallthru
        _
      %p1143 = scmp.le.s32.totalorder 2, %s24
      // Predicated region
      $region89: #{tpu_custom_call.1} parent=5 // pred_check
        %p1144 = pneg %p1143
      $region90: #{tpu_custom_call.1} parent=5 // pred_check_branch
        %1146 = sbr.rel (%p1144) target = $region92
      $region91: #{tpu_custom_call.1} parent=5 // pred_region
        %s1147 = ssub.s32 %s24, 2
        // Predicated region
        $region93: #{tpu_custom_call.1} parent=91 // pred_check
          %p1148 = pneg %p256
        $region94: #{tpu_custom_call.1} parent=91 // pred_check_branch
          %1150 = sbr.rel (%p1148) target = $region96
        $region95: #{tpu_custom_call.1} parent=91 // pred_region
          %s1151 = sand.u32 %s241, 1
          %s1152 = scalar_lea.sflag [#allocation8], %s1151
          %s1153 = sand.u32 %s241, 1
          %s1154 = smul.addr %s1153, 8
          %s1155 = scalar_lea.vmem [#allocation15], %s1154
          %1157 = dma.done %s1152, 128
        $region96: #{tpu_custom_call.1} parent=91 // pred_fallthru
          _
      $region92: #{tpu_custom_call.1} parent=5 // pred_fallthru
        _
    $region6: #{tpu_custom_call.1} parent=1 // loop_footer
      %s28 = sadd.s32 1, %s24
    $region7: #{tpu_custom_call.1} parent=1 // loop_footer_branch
      %23 = sbr.rel target = $region3
    $region8: #{tpu_custom_call.1} parent=1 // loop_exit
      _
    %1158 = vsyncpa [#allocation7], 1
    %s1159 = scalar_lea.sflag [#allocation7], 1
    %1160 = vsyncpa %s1159, 1
    %1161 = vsyncpa [#allocation10], 1
    %s1162 = scalar_lea.sflag [#allocation10], 1
    %1163 = vsyncpa %s1162, 1
    %1164 = vsyncpa [#allocation13], 1
    %1165 = vsyncpa [#allocation8], 1
    %s1166 = scalar_lea.sflag [#allocation8], 1
    %1167 = vsyncpa %s1166, 1

</llo_original>
